<compile_context>
chip_gen: v7x
topology: tpu7x:2x2x1
jax: 0.10.0
libtpu: 0.0.40
codegen_flags: <defaults>
</compile_context>

<pallas_src>
import functools

import jax
import jax.numpy as jnp
from jax.experimental import pallas as pl
from jax.experimental.pallas import tpu as pltpu


def _round_up(n, m):
    return ((n + m - 1) // m) * m


def _attention_kernel(x_ref, w3_ref, w1_ref, w2_ref, ws_ref, bias_ref, mw_ref,
                      o_ref, xpad_ref, xcol_ref, *, H, W, Cin, Cout, Cred, TAP):
    # x_ref   : (1, Cin, H*W)          input image, pixels flattened row-major
    # w3_ref  : (Cout, 9*TAP)          conv taps, (kh*3+kw)-major, zero-padded to TAP
    # w1_ref  : (Cred, Cout)           cSE fc1 weight (torch layout)
    # w2_ref  : (Cout, Cred)           cSE fc2 weight (torch layout)
    # ws_ref  : (1, Cout)              sSE 1x1 conv weight (row)
    # bias_ref: (Cout, 4)   col0=b3, col1=b1 (first Cred rows), col2=b2, [0,3]=bs
    # mw_ref  : (H*(W+2), 1)           1/(H*W) at valid columns, 0 at garbage columns
    # o_ref   : (1, Cout, H*W)         dense NCHW output (garbage columns compacted out)
    # xpad_ref: (Cin, (H+2)*(W+2)+2)   VMEM halo buffer (flattened zero-padded image)
    # xcol_ref: (9*TAP, H*(W+2))       VMEM fused-im2col operand
    WP = W + 2
    HPW = H * WP

    # ---- build the 1-pixel zero halo in VMEM (no wrapper pad -> no extra HBM pass)
    xpad_ref[...] = jnp.zeros_like(xpad_ref)
    for r in range(H):
        xpad_ref[:, pl.ds((r + 1) * WP + 1, W)] = x_ref[0, :, pl.ds(r * W, W)]

    # ---- fused im2col: stack the 9 lane-shifted tap slices along the sublane axis
    if TAP != Cin:                       # zero the sublane padding rows (their weights are 0)
        xcol_ref[...] = jnp.zeros_like(xcol_ref)
    for kh in range(3):
        for kw in range(3):
            t = kh * 3 + kw
            xcol_ref[pl.ds(t * TAP, Cin), :] = xpad_ref[:, pl.ds(kh * WP + kw, HPW)]

    # ---- 3x3 conv (padding=1) as ONE MXU matmul, K = 9*TAP, f32 accumulation
    acc = jnp.dot(w3_ref[...], xcol_ref[...], preferred_element_type=jnp.float32)
    b3 = bias_ref[:, 0:1]
    # NOTE: y >= 0 after this ReLU; the SE gate factoring below relies on it.
    y = jnp.maximum(acc + b3, 0.0)                                    # (Cout, HPW) f32

    # ---- channel SE: masked global mean on the MXU (mw folds mask and 1/(H*W))
    s = jnp.dot(y, mw_ref[...], preferred_element_type=jnp.float32)   # (Cout, 1)
    b1 = bias_ref[0:Cred, 1:2]
    b2 = bias_ref[:, 2:3]
    z1 = jnp.maximum(
        jnp.dot(w1_ref[...], s, preferred_element_type=jnp.float32) + b1, 0.0)
    z2 = jax.nn.sigmoid(
        jnp.dot(w2_ref[...], z1, preferred_element_type=jnp.float32) + b2)   # (Cout, 1)

    # ---- spatial SE: 1x1 conv channel reduce on the MXU
    bs = bias_ref[0:1, 3:4]
    m = jnp.dot(ws_ref[...], y, preferred_element_type=jnp.float32) + bs     # (1, HPW)

    # ---- max(y*z2, y*sigmoid(m)) == y * max(z2, sigmoid(m))  (valid since y >= 0)
    gate = jnp.maximum(z2, jax.nn.sigmoid(m))                          # (Cout, HPW)
    out = (y * gate).astype(o_ref.dtype)

    # ---- compact: drop the 2 garbage columns per image row while storing (dense NCHW)
    for r in range(H):
        o_ref[0, :, pl.ds(r * W, W)] = out[:, r * WP:r * WP + W]


def attention_block(x_nchw, params, *, conv_dtype=jnp.float32):
    """Pallas AttentionBlock.forward.  x_nchw: (B, Cin, H, W).

    conv_dtype: dtype of the conv matmul operands (activations + 3x3 weights).
      Use jnp.bfloat16 on v5e/v6e/v7x to halve the HBM/VMEM activation stream;
      accumulation and all SE / sigmoid / mean math stay float32.
    """
    w3, b3, w1, b1, w2, b2, ws, bs = params
    B, Cin, H, W = x_nchw.shape
    Cout = w3.shape[0]
    Cred = w1.shape[0]
    WP = W + 2
    HPW = H * WP                     # compute-layout pixels (2 garbage cols per row)
    HW = H * W
    PADLEN = (H + 2) * WP + 2        # halo length (+2 keeps the last tap slice in bounds)
    TAP = _round_up(Cin, 8)          # sublane-aligned tap stride in the im2col operand

    # Flatten pixels (free bitcast); optionally cast the activation stream.
    x_flat = x_nchw.reshape(B, Cin, HW).astype(conv_dtype)

    # (Cout, Cin, 3, 3) -> (Cout, 9*TAP), tap-major ((kh*3+kw)*TAP + cin), zero-padded.
    w3_taps = jnp.transpose(w3, (0, 2, 3, 1)).reshape(Cout, 9, Cin)
    w3_flat = jnp.pad(w3_taps, ((0, 0), (0, 0), (0, TAP - Cin))) \
                 .reshape(Cout, 9 * TAP).astype(conv_dtype)

    ws_row = ws.reshape(1, Cout).astype(jnp.float32)

    # Pack the small bias vectors into a single VMEM tile.
    bias_pack = jnp.zeros((Cout, 4), jnp.float32)
    bias_pack = bias_pack.at[:, 0].set(b3)
    bias_pack = bias_pack.at[:Cred, 1].set(b1)
    bias_pack = bias_pack.at[:, 2].set(b2)
    bias_pack = bias_pack.at[0, 3].set(bs[0])

    # Mean weights: 1/(H*W) at valid columns of the flattened (H, W+2) layout, else 0.
    mw = ((jnp.arange(HPW) % WP < W).astype(jnp.float32) / (H * W)).reshape(HPW, 1)

    kernel = functools.partial(_attention_kernel, H=H, W=W, Cin=Cin, Cout=Cout,
                               Cred=Cred, TAP=TAP)

    out = pl.pallas_call(
        kernel,
        out_shape=jax.ShapeDtypeStruct((B, Cout, HW), x_nchw.dtype),
        grid=(B,),
        in_specs=[
            pl.BlockSpec((1, Cin, HW), lambda b: (b, 0, 0)),      # input image
            pl.BlockSpec((Cout, 9 * TAP), lambda b: (0, 0)),      # fused conv taps
            pl.BlockSpec((Cred, Cout), lambda b: (0, 0)),         # cSE fc1
            pl.BlockSpec((Cout, Cred), lambda b: (0, 0)),         # cSE fc2
            pl.BlockSpec((1, Cout), lambda b: (0, 0)),            # sSE 1x1 weight
            pl.BlockSpec((Cout, 4), lambda b: (0, 0)),            # packed biases
            pl.BlockSpec((HPW, 1), lambda b: (0, 0)),             # masked mean weights
        ],
        out_specs=pl.BlockSpec((1, Cout, HW), lambda b: (b, 0, 0)),
        scratch_shapes=[
            pltpu.VMEM((Cin, PADLEN), conv_dtype),                # halo buffer
            pltpu.VMEM((9 * TAP, HPW), conv_dtype),               # fused im2col operand
        ],
        compiler_params=pltpu.CompilerParams(
            dimension_semantics=("parallel",),
            vmem_limit_bytes=32 * 1024 * 1024),
    )(x_flat, w3_flat, w1, w2, ws_row, bias_pack, mw)

    # Output is already dense NCHW: free reshape, no wrapper slice / transpose pass.
    return out.reshape(B, Cout, H, W)


def reference(x_nchw, params):
    """Pure-JAX reference matching the PyTorch module semantics."""
    w3, b3, w1, b1, w2, b2, ws, bs = params
    y = jax.lax.conv_general_dilated(
        x_nchw, w3, window_strides=(1, 1), padding=((1, 1), (1, 1)),
        dimension_numbers=('NCHW', 'OIHW', 'NCHW')) + b3.reshape(1, -1, 1, 1)
    y = jnp.maximum(y, 0.0)
    B, C, H, W = y.shape
    # channel SE
    s = y.reshape(B, C, -1).mean(axis=2)                              # (B, C)
    z1 = jnp.maximum(s @ w1.T + b1, 0.0)
    z2 = jax.nn.sigmoid(z1 @ w2.T + b2)
    cse = y * z2.reshape(B, C, 1, 1)
    # spatial SE
    m = jax.lax.conv_general_dilated(
        y, ws, window_strides=(1, 1), padding=((0, 0), (0, 0)),
        dimension_numbers=('NCHW', 'OIHW', 'NCHW')) + bs.reshape(1, 1, 1, 1)
    sse = y * jax.nn.sigmoid(m)
    return jnp.maximum(cse, sse)


if __name__ == "__main__":
    B, Cin, Cout, H, W = 2, 4, 8, 16, 16
    Cred = Cout // 2                                                  # reduction_ratio = 2

    key = jax.random.PRNGKey(0)
    ks = jax.random.split(key, 9)
    x = jax.random.normal(ks[0], (B, Cin, H, W), jnp.float32)
    # Deterministic synthetic parameters (shapes follow the module's __init__).
    w3 = jax.random.normal(ks[1], (Cout, Cin, 3, 3), jnp.float32) * 0.2   # Conv2d(dim, dim_out, 3)
    b3 = jax.random.normal(ks[2], (Cout,), jnp.float32) * 0.1
    w1 = jax.random.normal(ks[3], (Cred, Cout), jnp.float32) * 0.3        # cSE fc1
    b1 = jax.random.normal(ks[4], (Cred,), jnp.float32) * 0.1
    w2 = jax.random.normal(ks[5], (Cout, Cred), jnp.float32) * 0.3        # cSE fc2
    b2 = jax.random.normal(ks[6], (Cout,), jnp.float32) * 0.1
    ws = jax.random.normal(ks[7], (1, Cout, 1, 1), jnp.float32) * 0.3     # sSE 1x1 conv
    bs = jax.random.normal(ks[8], (1,), jnp.float32) * 0.1
    params = (w3, b3, w1, b1, w2, b2, ws, bs)

    ref = reference(x, params)

    # float32 path: semantics of the PyTorch module, tight tolerance.
    out = jax.block_until_ready(attention_block(x, params))
    assert out.shape == (B, Cout, H, W), out.shape
    if not jnp.allclose(out, ref, rtol=2e-3, atol=2e-3):
        max_err = float(jnp.max(jnp.abs(out - ref)))
        raise AssertionError(f"f32 Pallas output mismatch, max abs err = {max_err}")

    # bf16 conv-operand path (memory-bound win on v5e/v6e/v7x): bf16 matmul operands,
    # f32 accumulation and f32 SE math -> looser tolerance vs the f32 reference.
    out_bf16 = jax.block_until_ready(
        attention_block(x, params, conv_dtype=jnp.bfloat16))
    if not jnp.allclose(out_bf16, ref, rtol=1e-1, atol=1e-1):
        max_err = float(jnp.max(jnp.abs(out_bf16 - ref)))
        raise AssertionError(f"bf16 Pallas output mismatch, max abs err = {max_err}")

    print("KERNEL_OK")
</pallas_src>

<mosaic_0001>
module attributes {stable_mosaic.version = 11 : i64} {
  func.func @_attention_kernel(%arg0: i32, %arg1: memref<1x4x256xf32, #tpu.memory_space<vmem>>, %arg2: memref<8x72xf32, #tpu.memory_space<vmem>>, %arg3: memref<4x8xf32, #tpu.memory_space<vmem>>, %arg4: memref<8x4xf32, #tpu.memory_space<vmem>>, %arg5: memref<1x8xf32, #tpu.memory_space<vmem>>, %arg6: memref<8x4xf32, #tpu.memory_space<vmem>>, %arg7: memref<288x1xf32, #tpu.memory_space<vmem>>, %arg8: memref<1x8x256xf32, #tpu.memory_space<vmem>>, %arg9: memref<4x326xf32, #tpu.memory_space<vmem>>, %arg10: memref<72x288xf32, #tpu.memory_space<vmem>>) attributes {dimension_semantics = [#tpu.dimension_semantics<parallel>], iteration_bounds = array<i64: 2>, scalar_prefetch = 0 : i64, scratch_operands = 2 : i64, tpu.core_type = #tpu.core_type<tc>, window_params = [{transform_indices = @transform_0, window_bounds = array<i64: 1, 4, 256>}, {pipeline_mode = #tpu.pipeline_mode<synchronous>, transform_indices = @transform_1, window_bounds = array<i64: 8, 72>}, {pipeline_mode = #tpu.pipeline_mode<synchronous>, transform_indices = @transform_2, window_bounds = array<i64: 4, 8>}, {pipeline_mode = #tpu.pipeline_mode<synchronous>, transform_indices = @transform_3, window_bounds = array<i64: 8, 4>}, {pipeline_mode = #tpu.pipeline_mode<synchronous>, transform_indices = @transform_4, window_bounds = array<i64: 1, 8>}, {pipeline_mode = #tpu.pipeline_mode<synchronous>, transform_indices = @transform_5, window_bounds = array<i64: 8, 4>}, {pipeline_mode = #tpu.pipeline_mode<synchronous>, transform_indices = @transform_6, window_bounds = array<i64: 288, 1>}, {transform_indices = @transform_7, window_bounds = array<i64: 1, 8, 256>}]} {
    %cst = arith.constant 0.000000e+00 : f32
    %0 = vector.broadcast %cst : f32 to vector<4x326xf32>
    %c0 = arith.constant 0 : index
    %c0_0 = arith.constant 0 : index
    %1 = vector.load %arg9[%c0, %c0_0] : memref<4x326xf32, #tpu.memory_space<vmem>>, vector<4x326xf32>
    tpu.vector_store %arg9[%c0, %c0_0], %0 {strides = array<i32>} : memref<4x326xf32, #tpu.memory_space<vmem>>, vector<4x326xf32>,
    %c0_1 = arith.constant 0 : index
    %c0_2 = arith.constant 0 : index
    %c0_3 = arith.constant 0 : index
    %2 = vector.load %arg1[%c0_1, %c0_2, %c0_3] : memref<1x4x256xf32, #tpu.memory_space<vmem>>, vector<1x4x16xf32>
    %3 = vector.shape_cast %2 : vector<1x4x16xf32> to vector<4x16xf32>
    %c0_4 = arith.constant 0 : index
    %c19 = arith.constant 19 : index
    %4 = vector.load %arg9[%c0_4, %c19] : memref<4x326xf32, #tpu.memory_space<vmem>>, vector<4x16xf32>
    tpu.vector_store %arg9[%c0_4, %c19], %3 {strides = array<i32>} : memref<4x326xf32, #tpu.memory_space<vmem>>, vector<4x16xf32>,
    %c0_5 = arith.constant 0 : index
    %c0_6 = arith.constant 0 : index
    %c16 = arith.constant 16 : index
    %5 = vector.load %arg1[%c0_5, %c0_6, %c16] : memref<1x4x256xf32, #tpu.memory_space<vmem>>, vector<1x4x16xf32>
    %6 = vector.shape_cast %5 : vector<1x4x16xf32> to vector<4x16xf32>
    %c0_7 = arith.constant 0 : index
    %c37 = arith.constant 37 : index
    %7 = vector.load %arg9[%c0_7, %c37] : memref<4x326xf32, #tpu.memory_space<vmem>>, vector<4x16xf32>
    tpu.vector_store %arg9[%c0_7, %c37], %6 {strides = array<i32>} : memref<4x326xf32, #tpu.memory_space<vmem>>, vector<4x16xf32>,
    %c0_8 = arith.constant 0 : index
    %c0_9 = arith.constant 0 : index
    %c32 = arith.constant 32 : index
    %8 = vector.load %arg1[%c0_8, %c0_9, %c32] : memref<1x4x256xf32, #tpu.memory_space<vmem>>, vector<1x4x16xf32>
    %9 = vector.shape_cast %8 : vector<1x4x16xf32> to vector<4x16xf32>
    %c0_10 = arith.constant 0 : index
    %c55 = arith.constant 55 : index
    %10 = vector.load %arg9[%c0_10, %c55] : memref<4x326xf32, #tpu.memory_space<vmem>>, vector<4x16xf32>
    tpu.vector_store %arg9[%c0_10, %c55], %9 {strides = array<i32>} : memref<4x326xf32, #tpu.memory_space<vmem>>, vector<4x16xf32>,
    %c0_11 = arith.constant 0 : index
    %c0_12 = arith.constant 0 : index
    %c48 = arith.constant 48 : index
    %11 = vector.load %arg1[%c0_11, %c0_12, %c48] : memref<1x4x256xf32, #tpu.memory_space<vmem>>, vector<1x4x16xf32>
    %12 = vector.shape_cast %11 : vector<1x4x16xf32> to vector<4x16xf32>
    %c0_13 = arith.constant 0 : index
    %c73 = arith.constant 73 : index
    %13 = vector.load %arg9[%c0_13, %c73] : memref<4x326xf32, #tpu.memory_space<vmem>>, vector<4x16xf32>
    tpu.vector_store %arg9[%c0_13, %c73], %12 {strides = array<i32>} : memref<4x326xf32, #tpu.memory_space<vmem>>, vector<4x16xf32>,
    %c0_14 = arith.constant 0 : index
    %c0_15 = arith.constant 0 : index
    %c64 = arith.constant 64 : index
    %14 = vector.load %arg1[%c0_14, %c0_15, %c64] : memref<1x4x256xf32, #tpu.memory_space<vmem>>, vector<1x4x16xf32>
    %15 = vector.shape_cast %14 : vector<1x4x16xf32> to vector<4x16xf32>
    %c0_16 = arith.constant 0 : index
    %c91 = arith.constant 91 : index
    %16 = vector.load %arg9[%c0_16, %c91] : memref<4x326xf32, #tpu.memory_space<vmem>>, vector<4x16xf32>
    tpu.vector_store %arg9[%c0_16, %c91], %15 {strides = array<i32>} : memref<4x326xf32, #tpu.memory_space<vmem>>, vector<4x16xf32>,
    %c0_17 = arith.constant 0 : index
    %c0_18 = arith.constant 0 : index
    %c80 = arith.constant 80 : index
    %17 = vector.load %arg1[%c0_17, %c0_18, %c80] : memref<1x4x256xf32, #tpu.memory_space<vmem>>, vector<1x4x16xf32>
    %18 = vector.shape_cast %17 : vector<1x4x16xf32> to vector<4x16xf32>
    %c0_19 = arith.constant 0 : index
    %c109 = arith.constant 109 : index
    %19 = vector.load %arg9[%c0_19, %c109] : memref<4x326xf32, #tpu.memory_space<vmem>>, vector<4x16xf32>
    tpu.vector_store %arg9[%c0_19, %c109], %18 {strides = array<i32>} : memref<4x326xf32, #tpu.memory_space<vmem>>, vector<4x16xf32>,
    %c0_20 = arith.constant 0 : index
    %c0_21 = arith.constant 0 : index
    %c96 = arith.constant 96 : index
    %20 = vector.load %arg1[%c0_20, %c0_21, %c96] : memref<1x4x256xf32, #tpu.memory_space<vmem>>, vector<1x4x16xf32>
    %21 = vector.shape_cast %20 : vector<1x4x16xf32> to vector<4x16xf32>
    %c0_22 = arith.constant 0 : index
    %c127 = arith.constant 127 : index
    %22 = vector.load %arg9[%c0_22, %c127] : memref<4x326xf32, #tpu.memory_space<vmem>>, vector<4x16xf32>
    tpu.vector_store %arg9[%c0_22, %c127], %21 {strides = array<i32>} : memref<4x326xf32, #tpu.memory_space<vmem>>, vector<4x16xf32>,
    %c0_23 = arith.constant 0 : index
    %c0_24 = arith.constant 0 : index
    %c112 = arith.constant 112 : index
    %23 = vector.load %arg1[%c0_23, %c0_24, %c112] : memref<1x4x256xf32, #tpu.memory_space<vmem>>, vector<1x4x16xf32>
    %24 = vector.shape_cast %23 : vector<1x4x16xf32> to vector<4x16xf32>
    %c0_25 = arith.constant 0 : index
    %c145 = arith.constant 145 : index
    %25 = vector.load %arg9[%c0_25, %c145] : memref<4x326xf32, #tpu.memory_space<vmem>>, vector<4x16xf32>
    tpu.vector_store %arg9[%c0_25, %c145], %24 {strides = array<i32>} : memref<4x326xf32, #tpu.memory_space<vmem>>, vector<4x16xf32>,
    %c0_26 = arith.constant 0 : index
    %c0_27 = arith.constant 0 : index
    %c128 = arith.constant 128 : index
    %26 = vector.load %arg1[%c0_26, %c0_27, %c128] : memref<1x4x256xf32, #tpu.memory_space<vmem>>, vector<1x4x16xf32>
    %27 = vector.shape_cast %26 : vector<1x4x16xf32> to vector<4x16xf32>
    %c0_28 = arith.constant 0 : index
    %c163 = arith.constant 163 : index
    %28 = vector.load %arg9[%c0_28, %c163] : memref<4x326xf32, #tpu.memory_space<vmem>>, vector<4x16xf32>
    tpu.vector_store %arg9[%c0_28, %c163], %27 {strides = array<i32>} : memref<4x326xf32, #tpu.memory_space<vmem>>, vector<4x16xf32>,
    %c0_29 = arith.constant 0 : index
    %c0_30 = arith.constant 0 : index
    %c144 = arith.constant 144 : index
    %29 = vector.load %arg1[%c0_29, %c0_30, %c144] : memref<1x4x256xf32, #tpu.memory_space<vmem>>, vector<1x4x16xf32>
    %30 = vector.shape_cast %29 : vector<1x4x16xf32> to vector<4x16xf32>
    %c0_31 = arith.constant 0 : index
    %c181 = arith.constant 181 : index
    %31 = vector.load %arg9[%c0_31, %c181] : memref<4x326xf32, #tpu.memory_space<vmem>>, vector<4x16xf32>
    tpu.vector_store %arg9[%c0_31, %c181], %30 {strides = array<i32>} : memref<4x326xf32, #tpu.memory_space<vmem>>, vector<4x16xf32>,
    %c0_32 = arith.constant 0 : index
    %c0_33 = arith.constant 0 : index
    %c160 = arith.constant 160 : index
    %32 = vector.load %arg1[%c0_32, %c0_33, %c160] : memref<1x4x256xf32, #tpu.memory_space<vmem>>, vector<1x4x16xf32>
    %33 = vector.shape_cast %32 : vector<1x4x16xf32> to vector<4x16xf32>
    %c0_34 = arith.constant 0 : index
    %c199 = arith.constant 199 : index
    %34 = vector.load %arg9[%c0_34, %c199] : memref<4x326xf32, #tpu.memory_space<vmem>>, vector<4x16xf32>
    tpu.vector_store %arg9[%c0_34, %c199], %33 {strides = array<i32>} : memref<4x326xf32, #tpu.memory_space<vmem>>, vector<4x16xf32>,
    %c0_35 = arith.constant 0 : index
    %c0_36 = arith.constant 0 : index
    %c176 = arith.constant 176 : index
    %35 = vector.load %arg1[%c0_35, %c0_36, %c176] : memref<1x4x256xf32, #tpu.memory_space<vmem>>, vector<1x4x16xf32>
    %36 = vector.shape_cast %35 : vector<1x4x16xf32> to vector<4x16xf32>
    %c0_37 = arith.constant 0 : index
    %c217 = arith.constant 217 : index
    %37 = vector.load %arg9[%c0_37, %c217] : memref<4x326xf32, #tpu.memory_space<vmem>>, vector<4x16xf32>
    tpu.vector_store %arg9[%c0_37, %c217], %36 {strides = array<i32>} : memref<4x326xf32, #tpu.memory_space<vmem>>, vector<4x16xf32>,
    %c0_38 = arith.constant 0 : index
    %c0_39 = arith.constant 0 : index
    %c192 = arith.constant 192 : index
    %38 = vector.load %arg1[%c0_38, %c0_39, %c192] : memref<1x4x256xf32, #tpu.memory_space<vmem>>, vector<1x4x16xf32>
    %39 = vector.shape_cast %38 : vector<1x4x16xf32> to vector<4x16xf32>
    %c0_40 = arith.constant 0 : index
    %c235 = arith.constant 235 : index
    %40 = vector.load %arg9[%c0_40, %c235] : memref<4x326xf32, #tpu.memory_space<vmem>>, vector<4x16xf32>
    tpu.vector_store %arg9[%c0_40, %c235], %39 {strides = array<i32>} : memref<4x326xf32, #tpu.memory_space<vmem>>, vector<4x16xf32>,
    %c0_41 = arith.constant 0 : index
    %c0_42 = arith.constant 0 : index
    %c208 = arith.constant 208 : index
    %41 = vector.load %arg1[%c0_41, %c0_42, %c208] : memref<1x4x256xf32, #tpu.memory_space<vmem>>, vector<1x4x16xf32>
    %42 = vector.shape_cast %41 : vector<1x4x16xf32> to vector<4x16xf32>
    %c0_43 = arith.constant 0 : index
    %c253 = arith.constant 253 : index
    %43 = vector.load %arg9[%c0_43, %c253] : memref<4x326xf32, #tpu.memory_space<vmem>>, vector<4x16xf32>
    tpu.vector_store %arg9[%c0_43, %c253], %42 {strides = array<i32>} : memref<4x326xf32, #tpu.memory_space<vmem>>, vector<4x16xf32>,
    %c0_44 = arith.constant 0 : index
    %c0_45 = arith.constant 0 : index
    %c224 = arith.constant 224 : index
    %44 = vector.load %arg1[%c0_44, %c0_45, %c224] : memref<1x4x256xf32, #tpu.memory_space<vmem>>, vector<1x4x16xf32>
    %45 = vector.shape_cast %44 : vector<1x4x16xf32> to vector<4x16xf32>
    %c0_46 = arith.constant 0 : index
    %c271 = arith.constant 271 : index
    %46 = vector.load %arg9[%c0_46, %c271] : memref<4x326xf32, #tpu.memory_space<vmem>>, vector<4x16xf32>
    tpu.vector_store %arg9[%c0_46, %c271], %45 {strides = array<i32>} : memref<4x326xf32, #tpu.memory_space<vmem>>, vector<4x16xf32>,
    %c0_47 = arith.constant 0 : index
    %c0_48 = arith.constant 0 : index
    %c240 = arith.constant 240 : index
    %47 = vector.load %arg1[%c0_47, %c0_48, %c240] : memref<1x4x256xf32, #tpu.memory_space<vmem>>, vector<1x4x16xf32>
    %48 = vector.shape_cast %47 : vector<1x4x16xf32> to vector<4x16xf32>
    %c0_49 = arith.constant 0 : index
    %c289 = arith.constant 289 : index
    %49 = vector.load %arg9[%c0_49, %c289] : memref<4x326xf32, #tpu.memory_space<vmem>>, vector<4x16xf32>
    tpu.vector_store %arg9[%c0_49, %c289], %48 {strides = array<i32>} : memref<4x326xf32, #tpu.memory_space<vmem>>, vector<4x16xf32>,
    %cst_50 = arith.constant 0.000000e+00 : f32
    %50 = vector.broadcast %cst_50 : f32 to vector<72x288xf32>
    %c0_51 = arith.constant 0 : index
    %c0_52 = arith.constant 0 : index
    %51 = vector.load %arg10[%c0_51, %c0_52] : memref<72x288xf32, #tpu.memory_space<vmem>>, vector<72x288xf32>
    tpu.vector_store %arg10[%c0_51, %c0_52], %50 {strides = array<i32>} : memref<72x288xf32, #tpu.memory_space<vmem>>, vector<72x288xf32>,
    %c0_53 = arith.constant 0 : index
    %c0_54 = arith.constant 0 : index
    %52 = vector.load %arg9[%c0_53, %c0_54] : memref<4x326xf32, #tpu.memory_space<vmem>>, vector<4x288xf32>
    %c0_55 = arith.constant 0 : index
    %c0_56 = arith.constant 0 : index
    %53 = vector.load %arg10[%c0_55, %c0_56] : memref<72x288xf32, #tpu.memory_space<vmem>>, vector<4x288xf32>
    tpu.vector_store %arg10[%c0_55, %c0_56], %52 {strides = array<i32>} : memref<72x288xf32, #tpu.memory_space<vmem>>, vector<4x288xf32>,
    %c0_57 = arith.constant 0 : index
    %c1 = arith.constant 1 : index
    %54 = vector.load %arg9[%c0_57, %c1] : memref<4x326xf32, #tpu.memory_space<vmem>>, vector<4x288xf32>
    %c8 = arith.constant 8 : index
    %c0_58 = arith.constant 0 : index
    %55 = vector.load %arg10[%c8, %c0_58] : memref<72x288xf32, #tpu.memory_space<vmem>>, vector<4x288xf32>
    tpu.vector_store %arg10[%c8, %c0_58], %54 {strides = array<i32>} : memref<72x288xf32, #tpu.memory_space<vmem>>, vector<4x288xf32>,
    %c0_59 = arith.constant 0 : index
    %c2 = arith.constant 2 : index
    %56 = vector.load %arg9[%c0_59, %c2] : memref<4x326xf32, #tpu.memory_space<vmem>>, vector<4x288xf32>
    %c16_60 = arith.constant 16 : index
    %c0_61 = arith.constant 0 : index
    %57 = vector.load %arg10[%c16_60, %c0_61] : memref<72x288xf32, #tpu.memory_space<vmem>>, vector<4x288xf32>
    tpu.vector_store %arg10[%c16_60, %c0_61], %56 {strides = array<i32>} : memref<72x288xf32, #tpu.memory_space<vmem>>, vector<4x288xf32>,
    %c0_62 = arith.constant 0 : index
    %c18 = arith.constant 18 : index
    %58 = vector.load %arg9[%c0_62, %c18] : memref<4x326xf32, #tpu.memory_space<vmem>>, vector<4x288xf32>
    %c24 = arith.constant 24 : index
    %c0_63 = arith.constant 0 : index
    %59 = vector.load %arg10[%c24, %c0_63] : memref<72x288xf32, #tpu.memory_space<vmem>>, vector<4x288xf32>
    tpu.vector_store %arg10[%c24, %c0_63], %58 {strides = array<i32>} : memref<72x288xf32, #tpu.memory_space<vmem>>, vector<4x288xf32>,
    %c0_64 = arith.constant 0 : index
    %c19_65 = arith.constant 19 : index
    %60 = vector.load %arg9[%c0_64, %c19_65] : memref<4x326xf32, #tpu.memory_space<vmem>>, vector<4x288xf32>
    %c32_66 = arith.constant 32 : index
    %c0_67 = arith.constant 0 : index
    %61 = vector.load %arg10[%c32_66, %c0_67] : memref<72x288xf32, #tpu.memory_space<vmem>>, vector<4x288xf32>
    tpu.vector_store %arg10[%c32_66, %c0_67], %60 {strides = array<i32>} : memref<72x288xf32, #tpu.memory_space<vmem>>, vector<4x288xf32>,
    %c0_68 = arith.constant 0 : index
    %c20 = arith.constant 20 : index
    %62 = vector.load %arg9[%c0_68, %c20] : memref<4x326xf32, #tpu.memory_space<vmem>>, vector<4x288xf32>
    %c40 = arith.constant 40 : index
    %c0_69 = arith.constant 0 : index
    %63 = vector.load %arg10[%c40, %c0_69] : memref<72x288xf32, #tpu.memory_space<vmem>>, vector<4x288xf32>
    tpu.vector_store %arg10[%c40, %c0_69], %62 {strides = array<i32>} : memref<72x288xf32, #tpu.memory_space<vmem>>, vector<4x288xf32>,
    %c0_70 = arith.constant 0 : index
    %c36 = arith.constant 36 : index
    %64 = vector.load %arg9[%c0_70, %c36] : memref<4x326xf32, #tpu.memory_space<vmem>>, vector<4x288xf32>
    %c48_71 = arith.constant 48 : index
    %c0_72 = arith.constant 0 : index
    %65 = vector.load %arg10[%c48_71, %c0_72] : memref<72x288xf32, #tpu.memory_space<vmem>>, vector<4x288xf32>
    tpu.vector_store %arg10[%c48_71, %c0_72], %64 {strides = array<i32>} : memref<72x288xf32, #tpu.memory_space<vmem>>, vector<4x288xf32>,
    %c0_73 = arith.constant 0 : index
    %c37_74 = arith.constant 37 : index
    %66 = vector.load %arg9[%c0_73, %c37_74] : memref<4x326xf32, #tpu.memory_space<vmem>>, vector<4x288xf32>
    %c56 = arith.constant 56 : index
    %c0_75 = arith.constant 0 : index
    %67 = vector.load %arg10[%c56, %c0_75] : memref<72x288xf32, #tpu.memory_space<vmem>>, vector<4x288xf32>
    tpu.vector_store %arg10[%c56, %c0_75], %66 {strides = array<i32>} : memref<72x288xf32, #tpu.memory_space<vmem>>, vector<4x288xf32>,
    %c0_76 = arith.constant 0 : index
    %c38 = arith.constant 38 : index
    %68 = vector.load %arg9[%c0_76, %c38] : memref<4x326xf32, #tpu.memory_space<vmem>>, vector<4x288xf32>
    %c64_77 = arith.constant 64 : index
    %c0_78 = arith.constant 0 : index
    %69 = vector.load %arg10[%c64_77, %c0_78] : memref<72x288xf32, #tpu.memory_space<vmem>>, vector<4x288xf32>
    tpu.vector_store %arg10[%c64_77, %c0_78], %68 {strides = array<i32>} : memref<72x288xf32, #tpu.memory_space<vmem>>, vector<4x288xf32>,
    %c0_79 = arith.constant 0 : index
    %c0_80 = arith.constant 0 : index
    %70 = vector.load %arg2[%c0_79, %c0_80] : memref<8x72xf32, #tpu.memory_space<vmem>>, vector<8x72xf32>
    %c0_81 = arith.constant 0 : index
    %c0_82 = arith.constant 0 : index
    %71 = vector.load %arg10[%c0_81, %c0_82] : memref<72x288xf32, #tpu.memory_space<vmem>>, vector<72x288xf32>
    %cst_83 = arith.constant dense<0.000000e+00> : vector<8x288xf32>
    %72 = tpu.matmul %70, %71, %cst_83 {dimension_numbers = #tpu.dot_dimension_numbers<[1], [0], [0], [1], [0, 0, 1, 1], [], []>} : vector<8x72xf32>, vector<72x288xf32>, vector<8x288xf32> -> vector<8x288xf32>
    %c0_84 = arith.constant 0 : index
    %c0_85 = arith.constant 0 : index
    %73 = vector.load %arg6[%c0_84, %c0_85] : memref<8x4xf32, #tpu.memory_space<vmem>>, vector<8x1xf32>
    %74 = vector.broadcast %73 : vector<8x1xf32> to vector<8x288xf32>
    %75 = arith.addf %72, %74 : vector<8x288xf32>
    %cst_86 = arith.constant 0.000000e+00 : f32
    %76 = vector.broadcast %cst_86 : f32 to vector<8x288xf32>
    %77 = arith.maximumf %75, %76 : vector<8x288xf32>
    %c0_87 = arith.constant 0 : index
    %c0_88 = arith.constant 0 : index
    %78 = vector.load %arg7[%c0_87, %c0_88] : memref<288x1xf32, #tpu.memory_space<vmem>>, vector<288x1xf32>
    %cst_89 = arith.constant dense<0.000000e+00> : vector<8x1xf32>
    %79 = tpu.matmul %77, %78, %cst_89 {dimension_numbers = #tpu.dot_dimension_numbers<[1], [0], [0], [1], [0, 0, 1, 1], [], []>} : vector<8x288xf32>, vector<288x1xf32>, vector<8x1xf32> -> vector<8x1xf32>
    %c0_90 = arith.constant 0 : index
    %c1_91 = arith.constant 1 : index
    %80 = vector.load %arg6[%c0_90, %c1_91] : memref<8x4xf32, #tpu.memory_space<vmem>>, vector<4x1xf32>
    %c0_92 = arith.constant 0 : index
    %c2_93 = arith.constant 2 : index
    %81 = vector.load %arg6[%c0_92, %c2_93] : memref<8x4xf32, #tpu.memory_space<vmem>>, vector<8x1xf32>
    %c0_94 = arith.constant 0 : index
    %c0_95 = arith.constant 0 : index
    %82 = vector.load %arg3[%c0_94, %c0_95] : memref<4x8xf32, #tpu.memory_space<vmem>>, vector<4x8xf32>
    %cst_96 = arith.constant dense<0.000000e+00> : vector<4x1xf32>
    %83 = tpu.matmul %82, %79, %cst_96 {dimension_numbers = #tpu.dot_dimension_numbers<[1], [0], [0], [1], [0, 0, 1, 1], [], []>} : vector<4x8xf32>, vector<8x1xf32>, vector<4x1xf32> -> vector<4x1xf32>
    %84 = arith.addf %83, %80 : vector<4x1xf32>
    %cst_97 = arith.constant 0.000000e+00 : f32
    %85 = vector.broadcast %cst_97 : f32 to vector<4x1xf32>
    %86 = arith.maximumf %84, %85 : vector<4x1xf32>
    %c0_98 = arith.constant 0 : index
    %c0_99 = arith.constant 0 : index
    %87 = vector.load %arg4[%c0_98, %c0_99] : memref<8x4xf32, #tpu.memory_space<vmem>>, vector<8x4xf32>
    %cst_100 = arith.constant dense<0.000000e+00> : vector<8x1xf32>
    %88 = tpu.matmul %87, %86, %cst_100 {dimension_numbers = #tpu.dot_dimension_numbers<[1], [0], [0], [1], [0, 0, 1, 1], [], []>} : vector<8x4xf32>, vector<4x1xf32>, vector<8x1xf32> -> vector<8x1xf32>
    %89 = arith.addf %88, %81 : vector<8x1xf32>
    %90 = arith.negf %89 : vector<8x1xf32>
    %91 = math.exp %90 : vector<8x1xf32>
    %cst_101 = arith.constant 1.000000e+00 : f32
    %92 = vector.broadcast %cst_101 : f32 to vector<8x1xf32>
    %93 = arith.addf %92, %91 : vector<8x1xf32>
    %94 = arith.divf %92, %93 : vector<8x1xf32>
    %c0_102 = arith.constant 0 : index
    %c3 = arith.constant 3 : index
    %95 = vector.load %arg6[%c0_102, %c3] : memref<8x4xf32, #tpu.memory_space<vmem>>, vector<1x1xf32>
    %c0_103 = arith.constant 0 : index
    %c0_104 = arith.constant 0 : index
    %96 = vector.load %arg5[%c0_103, %c0_104] : memref<1x8xf32, #tpu.memory_space<vmem>>, vector<1x8xf32>
    %cst_105 = arith.constant dense<0.000000e+00> : vector<1x288xf32>
    %97 = tpu.matmul %96, %77, %cst_105 {dimension_numbers = #tpu.dot_dimension_numbers<[1], [0], [0], [1], [0, 0, 1, 1], [], []>} : vector<1x8xf32>, vector<8x288xf32>, vector<1x288xf32> -> vector<1x288xf32>
    %98 = vector.broadcast %95 : vector<1x1xf32> to vector<1x288xf32>
    %99 = arith.addf %97, %98 : vector<1x288xf32>
    %100 = arith.negf %99 : vector<1x288xf32>
    %101 = math.exp %100 : vector<1x288xf32>
    %cst_106 = arith.constant 1.000000e+00 : f32
    %102 = vector.broadcast %cst_106 : f32 to vector<1x288xf32>
    %103 = arith.addf %102, %101 : vector<1x288xf32>
    %104 = arith.divf %102, %103 : vector<1x288xf32>
    %105 = vector.broadcast %94 : vector<8x1xf32> to vector<8x288xf32>
    %106 = vector.broadcast %104 : vector<1x288xf32> to vector<8x288xf32>
    %107 = arith.maximumf %105, %106 : vector<8x288xf32>
    %108 = arith.mulf %77, %107 : vector<8x288xf32>
    %109 = vector.extract_strided_slice %108 {offsets = [0, 0], sizes = [8, 16], strides = [1, 1]} : vector<8x288xf32> to vector<8x16xf32>
    %c0_107 = arith.constant 0 : index
    %c0_108 = arith.constant 0 : index
    %c0_109 = arith.constant 0 : index
    %110 = vector.load %arg8[%c0_107, %c0_108, %c0_109] : memref<1x8x256xf32, #tpu.memory_space<vmem>>, vector<1x8x16xf32>
    %111 = vector.shape_cast %110 : vector<1x8x16xf32> to vector<8x16xf32>
    %112 = vector.shape_cast %109 : vector<8x16xf32> to vector<1x8x16xf32>
    tpu.vector_store %arg8[%c0_107, %c0_108, %c0_109], %112 {strides = array<i32>} : memref<1x8x256xf32, #tpu.memory_space<vmem>>, vector<1x8x16xf32>,
    %113 = vector.extract_strided_slice %108 {offsets = [0, 18], sizes = [8, 16], strides = [1, 1]} : vector<8x288xf32> to vector<8x16xf32>
    %c0_110 = arith.constant 0 : index
    %c0_111 = arith.constant 0 : index
    %c16_112 = arith.constant 16 : index
    %114 = vector.load %arg8[%c0_110, %c0_111, %c16_112] : memref<1x8x256xf32, #tpu.memory_space<vmem>>, vector<1x8x16xf32>
    %115 = vector.shape_cast %114 : vector<1x8x16xf32> to vector<8x16xf32>
    %116 = vector.shape_cast %113 : vector<8x16xf32> to vector<1x8x16xf32>
    tpu.vector_store %arg8[%c0_110, %c0_111, %c16_112], %116 {strides = array<i32>} : memref<1x8x256xf32, #tpu.memory_space<vmem>>, vector<1x8x16xf32>,
    %117 = vector.extract_strided_slice %108 {offsets = [0, 36], sizes = [8, 16], strides = [1, 1]} : vector<8x288xf32> to vector<8x16xf32>
    %c0_113 = arith.constant 0 : index
    %c0_114 = arith.constant 0 : index
    %c32_115 = arith.constant 32 : index
    %118 = vector.load %arg8[%c0_113, %c0_114, %c32_115] : memref<1x8x256xf32, #tpu.memory_space<vmem>>, vector<1x8x16xf32>
    %119 = vector.shape_cast %118 : vector<1x8x16xf32> to vector<8x16xf32>
    %120 = vector.shape_cast %117 : vector<8x16xf32> to vector<1x8x16xf32>
    tpu.vector_store %arg8[%c0_113, %c0_114, %c32_115], %120 {strides = array<i32>} : memref<1x8x256xf32, #tpu.memory_space<vmem>>, vector<1x8x16xf32>,
    %121 = vector.extract_strided_slice %108 {offsets = [0, 54], sizes = [8, 16], strides = [1, 1]} : vector<8x288xf32> to vector<8x16xf32>
    %c0_116 = arith.constant 0 : index
    %c0_117 = arith.constant 0 : index
    %c48_118 = arith.constant 48 : index
    %122 = vector.load %arg8[%c0_116, %c0_117, %c48_118] : memref<1x8x256xf32, #tpu.memory_space<vmem>>, vector<1x8x16xf32>
    %123 = vector.shape_cast %122 : vector<1x8x16xf32> to vector<8x16xf32>
    %124 = vector.shape_cast %121 : vector<8x16xf32> to vector<1x8x16xf32>
    tpu.vector_store %arg8[%c0_116, %c0_117, %c48_118], %124 {strides = array<i32>} : memref<1x8x256xf32, #tpu.memory_space<vmem>>, vector<1x8x16xf32>,
    %125 = vector.extract_strided_slice %108 {offsets = [0, 72], sizes = [8, 16], strides = [1, 1]} : vector<8x288xf32> to vector<8x16xf32>
    %c0_119 = arith.constant 0 : index
    %c0_120 = arith.constant 0 : index
    %c64_121 = arith.constant 64 : index
    %126 = vector.load %arg8[%c0_119, %c0_120, %c64_121] : memref<1x8x256xf32, #tpu.memory_space<vmem>>, vector<1x8x16xf32>
    %127 = vector.shape_cast %126 : vector<1x8x16xf32> to vector<8x16xf32>
    %128 = vector.shape_cast %125 : vector<8x16xf32> to vector<1x8x16xf32>
    tpu.vector_store %arg8[%c0_119, %c0_120, %c64_121], %128 {strides = array<i32>} : memref<1x8x256xf32, #tpu.memory_space<vmem>>, vector<1x8x16xf32>,
    %129 = vector.extract_strided_slice %108 {offsets = [0, 90], sizes = [8, 16], strides = [1, 1]} : vector<8x288xf32> to vector<8x16xf32>
    %c0_122 = arith.constant 0 : index
    %c0_123 = arith.constant 0 : index
    %c80_124 = arith.constant 80 : index
    %130 = vector.load %arg8[%c0_122, %c0_123, %c80_124] : memref<1x8x256xf32, #tpu.memory_space<vmem>>, vector<1x8x16xf32>
    %131 = vector.shape_cast %130 : vector<1x8x16xf32> to vector<8x16xf32>
    %132 = vector.shape_cast %129 : vector<8x16xf32> to vector<1x8x16xf32>
    tpu.vector_store %arg8[%c0_122, %c0_123, %c80_124], %132 {strides = array<i32>} : memref<1x8x256xf32, #tpu.memory_space<vmem>>, vector<1x8x16xf32>,
    %133 = vector.extract_strided_slice %108 {offsets = [0, 108], sizes = [8, 16], strides = [1, 1]} : vector<8x288xf32> to vector<8x16xf32>
    %c0_125 = arith.constant 0 : index
    %c0_126 = arith.constant 0 : index
    %c96_127 = arith.constant 96 : index
    %134 = vector.load %arg8[%c0_125, %c0_126, %c96_127] : memref<1x8x256xf32, #tpu.memory_space<vmem>>, vector<1x8x16xf32>
    %135 = vector.shape_cast %134 : vector<1x8x16xf32> to vector<8x16xf32>
    %136 = vector.shape_cast %133 : vector<8x16xf32> to vector<1x8x16xf32>
    tpu.vector_store %arg8[%c0_125, %c0_126, %c96_127], %136 {strides = array<i32>} : memref<1x8x256xf32, #tpu.memory_space<vmem>>, vector<1x8x16xf32>,
    %137 = vector.extract_strided_slice %108 {offsets = [0, 126], sizes = [8, 16], strides = [1, 1]} : vector<8x288xf32> to vector<8x16xf32>
    %c0_128 = arith.constant 0 : index
    %c0_129 = arith.constant 0 : index
    %c112_130 = arith.constant 112 : index
    %138 = vector.load %arg8[%c0_128, %c0_129, %c112_130] : memref<1x8x256xf32, #tpu.memory_space<vmem>>, vector<1x8x16xf32>
    %139 = vector.shape_cast %138 : vector<1x8x16xf32> to vector<8x16xf32>
    %140 = vector.shape_cast %137 : vector<8x16xf32> to vector<1x8x16xf32>
    tpu.vector_store %arg8[%c0_128, %c0_129, %c112_130], %140 {strides = array<i32>} : memref<1x8x256xf32, #tpu.memory_space<vmem>>, vector<1x8x16xf32>,
    %141 = vector.extract_strided_slice %108 {offsets = [0, 144], sizes = [8, 16], strides = [1, 1]} : vector<8x288xf32> to vector<8x16xf32>
    %c0_131 = arith.constant 0 : index
    %c0_132 = arith.constant 0 : index
    %c128_133 = arith.constant 128 : index
    %142 = vector.load %arg8[%c0_131, %c0_132, %c128_133] : memref<1x8x256xf32, #tpu.memory_space<vmem>>, vector<1x8x16xf32>
    %143 = vector.shape_cast %142 : vector<1x8x16xf32> to vector<8x16xf32>
    %144 = vector.shape_cast %141 : vector<8x16xf32> to vector<1x8x16xf32>
    tpu.vector_store %arg8[%c0_131, %c0_132, %c128_133], %144 {strides = array<i32>} : memref<1x8x256xf32, #tpu.memory_space<vmem>>, vector<1x8x16xf32>,
    %145 = vector.extract_strided_slice %108 {offsets = [0, 162], sizes = [8, 16], strides = [1, 1]} : vector<8x288xf32> to vector<8x16xf32>
    %c0_134 = arith.constant 0 : index
    %c0_135 = arith.constant 0 : index
    %c144_136 = arith.constant 144 : index
    %146 = vector.load %arg8[%c0_134, %c0_135, %c144_136] : memref<1x8x256xf32, #tpu.memory_space<vmem>>, vector<1x8x16xf32>
    %147 = vector.shape_cast %146 : vector<1x8x16xf32> to vector<8x16xf32>
    %148 = vector.shape_cast %145 : vector<8x16xf32> to vector<1x8x16xf32>
    tpu.vector_store %arg8[%c0_134, %c0_135, %c144_136], %148 {strides = array<i32>} : memref<1x8x256xf32, #tpu.memory_space<vmem>>, vector<1x8x16xf32>,
    %149 = vector.extract_strided_slice %108 {offsets = [0, 180], sizes = [8, 16], strides = [1, 1]} : vector<8x288xf32> to vector<8x16xf32>
    %c0_137 = arith.constant 0 : index
    %c0_138 = arith.constant 0 : index
    %c160_139 = arith.constant 160 : index
    %150 = vector.load %arg8[%c0_137, %c0_138, %c160_139] : memref<1x8x256xf32, #tpu.memory_space<vmem>>, vector<1x8x16xf32>
    %151 = vector.shape_cast %150 : vector<1x8x16xf32> to vector<8x16xf32>
    %152 = vector.shape_cast %149 : vector<8x16xf32> to vector<1x8x16xf32>
    tpu.vector_store %arg8[%c0_137, %c0_138, %c160_139], %152 {strides = array<i32>} : memref<1x8x256xf32, #tpu.memory_space<vmem>>, vector<1x8x16xf32>,
    %153 = vector.extract_strided_slice %108 {offsets = [0, 198], sizes = [8, 16], strides = [1, 1]} : vector<8x288xf32> to vector<8x16xf32>
    %c0_140 = arith.constant 0 : index
    %c0_141 = arith.constant 0 : index
    %c176_142 = arith.constant 176 : index
    %154 = vector.load %arg8[%c0_140, %c0_141, %c176_142] : memref<1x8x256xf32, #tpu.memory_space<vmem>>, vector<1x8x16xf32>
    %155 = vector.shape_cast %154 : vector<1x8x16xf32> to vector<8x16xf32>
    %156 = vector.shape_cast %153 : vector<8x16xf32> to vector<1x8x16xf32>
    tpu.vector_store %arg8[%c0_140, %c0_141, %c176_142], %156 {strides = array<i32>} : memref<1x8x256xf32, #tpu.memory_space<vmem>>, vector<1x8x16xf32>,
    %157 = vector.extract_strided_slice %108 {offsets = [0, 216], sizes = [8, 16], strides = [1, 1]} : vector<8x288xf32> to vector<8x16xf32>
    %c0_143 = arith.constant 0 : index
    %c0_144 = arith.constant 0 : index
    %c192_145 = arith.constant 192 : index
    %158 = vector.load %arg8[%c0_143, %c0_144, %c192_145] : memref<1x8x256xf32, #tpu.memory_space<vmem>>, vector<1x8x16xf32>
    %159 = vector.shape_cast %158 : vector<1x8x16xf32> to vector<8x16xf32>
    %160 = vector.shape_cast %157 : vector<8x16xf32> to vector<1x8x16xf32>
    tpu.vector_store %arg8[%c0_143, %c0_144, %c192_145], %160 {strides = array<i32>} : memref<1x8x256xf32, #tpu.memory_space<vmem>>, vector<1x8x16xf32>,
    %161 = vector.extract_strided_slice %108 {offsets = [0, 234], sizes = [8, 16], strides = [1, 1]} : vector<8x288xf32> to vector<8x16xf32>
    %c0_146 = arith.constant 0 : index
    %c0_147 = arith.constant 0 : index
    %c208_148 = arith.constant 208 : index
    %162 = vector.load %arg8[%c0_146, %c0_147, %c208_148] : memref<1x8x256xf32, #tpu.memory_space<vmem>>, vector<1x8x16xf32>
    %163 = vector.shape_cast %162 : vector<1x8x16xf32> to vector<8x16xf32>
    %164 = vector.shape_cast %161 : vector<8x16xf32> to vector<1x8x16xf32>
    tpu.vector_store %arg8[%c0_146, %c0_147, %c208_148], %164 {strides = array<i32>} : memref<1x8x256xf32, #tpu.memory_space<vmem>>, vector<1x8x16xf32>,
    %165 = vector.extract_strided_slice %108 {offsets = [0, 252], sizes = [8, 16], strides = [1, 1]} : vector<8x288xf32> to vector<8x16xf32>
    %c0_149 = arith.constant 0 : index
    %c0_150 = arith.constant 0 : index
    %c224_151 = arith.constant 224 : index
    %166 = vector.load %arg8[%c0_149, %c0_150, %c224_151] : memref<1x8x256xf32, #tpu.memory_space<vmem>>, vector<1x8x16xf32>
    %167 = vector.shape_cast %166 : vector<1x8x16xf32> to vector<8x16xf32>
    %168 = vector.shape_cast %165 : vector<8x16xf32> to vector<1x8x16xf32>
    tpu.vector_store %arg8[%c0_149, %c0_150, %c224_151], %168 {strides = array<i32>} : memref<1x8x256xf32, #tpu.memory_space<vmem>>, vector<1x8x16xf32>,
    %169 = vector.extract_strided_slice %108 {offsets = [0, 270], sizes = [8, 16], strides = [1, 1]} : vector<8x288xf32> to vector<8x16xf32>
    %c0_152 = arith.constant 0 : index
    %c0_153 = arith.constant 0 : index
    %c240_154 = arith.constant 240 : index
    %170 = vector.load %arg8[%c0_152, %c0_153, %c240_154] : memref<1x8x256xf32, #tpu.memory_space<vmem>>, vector<1x8x16xf32>
    %171 = vector.shape_cast %170 : vector<1x8x16xf32> to vector<8x16xf32>
    %172 = vector.shape_cast %169 : vector<8x16xf32> to vector<1x8x16xf32>
    tpu.vector_store %arg8[%c0_152, %c0_153, %c240_154], %172 {strides = array<i32>} : memref<1x8x256xf32, #tpu.memory_space<vmem>>, vector<1x8x16xf32>,
    return
  }
  func.func @transform_0(%arg0: i32) -> (i32, i32, i32) {
    %c0_i32 = arith.constant 0 : i32
    %c0_i32_0 = arith.constant 0 : i32
    %c0_i32_1 = arith.constant 0 : i32
    return %arg0, %c0_i32, %c0_i32_0 : i32, i32, i32
  }
  func.func @transform_1(%arg0: i32) -> (i32, i32) {
    %c0_i32 = arith.constant 0 : i32
    %c0_i32_0 = arith.constant 0 : i32
    %c0_i32_1 = arith.constant 0 : i32
    return %c0_i32, %c0_i32_0 : i32, i32
  }
  func.func @transform_2(%arg0: i32) -> (i32, i32) {
    %c0_i32 = arith.constant 0 : i32
    %c0_i32_0 = arith.constant 0 : i32
    %c0_i32_1 = arith.constant 0 : i32
    return %c0_i32, %c0_i32_0 : i32, i32
  }
  func.func @transform_3(%arg0: i32) -> (i32, i32) {
    %c0_i32 = arith.constant 0 : i32
    %c0_i32_0 = arith.constant 0 : i32
    %c0_i32_1 = arith.constant 0 : i32
    return %c0_i32, %c0_i32_0 : i32, i32
  }
  func.func @transform_4(%arg0: i32) -> (i32, i32) {
    %c0_i32 = arith.constant 0 : i32
    %c0_i32_0 = arith.constant 0 : i32
    %c0_i32_1 = arith.constant 0 : i32
    return %c0_i32, %c0_i32_0 : i32, i32
  }
  func.func @transform_5(%arg0: i32) -> (i32, i32) {
    %c0_i32 = arith.constant 0 : i32
    %c0_i32_0 = arith.constant 0 : i32
    %c0_i32_1 = arith.constant 0 : i32
    return %c0_i32, %c0_i32_0 : i32, i32
  }
  func.func @transform_6(%arg0: i32) -> (i32, i32) {
    %c0_i32 = arith.constant 0 : i32
    %c0_i32_0 = arith.constant 0 : i32
    %c0_i32_1 = arith.constant 0 : i32
    return %c0_i32, %c0_i32_0 : i32, i32
  }
  func.func @transform_7(%arg0: i32) -> (i32, i32, i32) {
    %c0_i32 = arith.constant 0 : i32
    %c0_i32_0 = arith.constant 0 : i32
    %c0_i32_1 = arith.constant 0 : i32
    return %arg0, %c0_i32, %c0_i32_0 : i32, i32, i32
  }
}

</mosaic_0001>

<llo_original>
// kernel: tpu_custom_call.1
$region0: #{tpu_custom_call.1}
  #allocation0 [shape = 'u32[]', space=smem, size = 0x4, offset = 0x4, fixed_abs, tag = 'smem constant byte address 0x4 - core index']
  #allocation1 [shape = 'u32[144,128]{1,0:T(1,128)}', space=vmem, size = 0x12000, scoped, tag = 'internal scratch']
  #allocation2 [shape = 'f32[4,326]{1,0:T(4,128)}', space=vmem, size = 0x1800, scoped, tag = 'scratch operand']
  #allocation3 [shape = 'f32[72,288]{1,0:T(8,128)}', space=vmem, size = 0x1b000, scoped, tag = 'scratch operand']
  %s0 = inlined_call_operand.vmem [shape: f32[2,4,256], index: 0, kind: input, shape index: {}]
  %s1 = inlined_call_operand.vmem [shape: f32[8,72], index: 1, kind: input, shape index: {}]
  %s2 = inlined_call_operand.vmem [shape: f32[4,8], index: 2, kind: input, shape index: {}]
  %s3 = inlined_call_operand.vmem [shape: f32[8,4], index: 3, kind: input, shape index: {}]
  %s4 = inlined_call_operand.vmem [shape: f32[1,8], index: 4, kind: input, shape index: {}]
  %s5 = inlined_call_operand.vmem [shape: f32[8,4], index: 5, kind: input, shape index: {}]
  %s6 = inlined_call_operand.vmem [shape: f32[288,1], index: 6, kind: input, shape index: {}]
  %s7 = inlined_call_operand.hbm [shape: f32[2,8,256], index: 7, kind: output, shape index: {}]
  %s8 = sld [smem:[#allocation0]]
  $region61: #{tpu_custom_call.1} parent=0
    _
  %s10 = ssub.s32 1, %s8
  %s11 = scalar_select 0, %s10, %s8
  $region1: #{tpu_custom_call.1} parent=0
    #allocation4 [shape = 'u8[16384]{0}', space=vmem, size = 0x4000, scoped, tag = 'output window, operand 0']
    #allocation5 [shape = 's32[2]{0}', space=sflag, size = 0x8, scoped, tag = 'scoped memory for tpu_custom_call.1']
    %12 = vsyncpa [#allocation5], 0
    %s13 = scalar_lea.sflag [#allocation5], 1
    %14 = vsyncpa %s13, 0
    loop: start=0, step=1, limit=4
    $region2: #{tpu_custom_call.1} parent=1 // loop_pre_header
      _
    $region3: #{tpu_custom_call.1} parent=1 // loop_header
      %s16 = sphi 0, %s20
      %p17 = scmp.ge.s32.totalorder %s16, 4
      %s26 = sphi 0, %s28
      %s29 = sphi 0, %s26
      %s30 = sphi 0, %s29
      %s46 = sphi 0, %s30
      %s50 = sphi 0, %s50
      %s52 = sphi 0, %s50
      %s53 = sphi 0, %s52
      %s67 = sphi 0, %s53
      %s71 = sphi 0, %s71
      %s73 = sphi 0, %s71
      %s74 = sphi 0, %s73
      %s88 = sphi 0, %s74
      %s92 = sphi 0, %s92
      %s94 = sphi 0, %s92
      %s95 = sphi 0, %s94
      %s109 = sphi 0, %s95
      %s113 = sphi 0, %s113
      %s115 = sphi 0, %s113
      %s116 = sphi 0, %s115
      %s130 = sphi 0, %s116
      %s134 = sphi 0, %s134
      %s136 = sphi 0, %s134
      %s137 = sphi 0, %s136
      %s151 = sphi 0, %s137
      %s155 = sphi 0, %s155
      %s157 = sphi 0, %s155
      %s158 = sphi 0, %s157
      %s172 = sphi 0, %s158
      %s178 = sphi 0, %s180
      %s181 = sphi 0, %s178
      %s182 = sphi 0, %s181
      %s198 = sphi 0, %s182
    $region4: #{tpu_custom_call.1} parent=1 // loop_header_branch
      %19 = sbr.rel (%p17) target = $region8
    $region5: #{tpu_custom_call.1} parent=1 // loop_body
      %s21 = ssub.s32 %s16, 1
      %s22 = ssub.s32 %s16, 2
      %s23 = sadd.s32 %s16, 1
      %s24 = ssub.s32 %s16, %s23
      %p25 = scmp.eq.s32.totalorder %s24, 0
      %s27 = sadd.s32 %s26, 1
      %s28 = scalar_select %p25, %s26, %s27
      %p31 = pneg %p25
      %p32 = scmp.eq.s32.totalorder %s16, 1
      %p33 = por %p31, %p32
      %p34 = scmp.ne.s32.totalorder %s26, %s29
      %p35 = scmp.eq.s32.totalorder %s16, 0
      %p36 = por %p34, %p35
      %p37 = scmp.ne.s32.totalorder %s26, %s29
      %p38 = scmp.eq.s32.totalorder %s21, 1
      %p39 = por %p37, %p38
      %p40 = scmp.ne.s32.totalorder %s29, %s30
      %p41 = scmp.eq.s32.totalorder %s21, 0
      %p42 = por %p40, %p41
      %p43 = scmp.ne.s32.totalorder %s29, %s30
      %p44 = scmp.eq.s32.totalorder %s22, 1
      %p45 = por %p43, %p44
      %p47 = scmp.ne.s32.totalorder %s30, %s46
      %p48 = scmp.eq.s32.totalorder %s22, 0
      %p49 = por %p47, %p48
      %s51 = sadd.s32 %s50, 1
      %p54 = scmp.eq.s32.totalorder %s16, 1
      %p55 = scmp.ne.s32.totalorder %s50, %s52
      %p56 = scmp.eq.s32.totalorder %s16, 0
      %p57 = por %p55, %p56
      %p58 = scmp.ne.s32.totalorder %s50, %s52
      %p59 = scmp.eq.s32.totalorder %s21, 1
      %p60 = por %p58, %p59
      %p61 = scmp.ne.s32.totalorder %s52, %s53
      %p62 = scmp.eq.s32.totalorder %s21, 0
      %p63 = por %p61, %p62
      %p64 = scmp.ne.s32.totalorder %s52, %s53
      %p65 = scmp.eq.s32.totalorder %s22, 1
      %p66 = por %p64, %p65
      %p68 = scmp.ne.s32.totalorder %s53, %s67
      %p69 = scmp.eq.s32.totalorder %s22, 0
      %p70 = por %p68, %p69
      %s72 = sadd.s32 %s71, 1
      %p75 = scmp.eq.s32.totalorder %s16, 1
      %p76 = scmp.ne.s32.totalorder %s71, %s73
      %p77 = scmp.eq.s32.totalorder %s16, 0
      %p78 = por %p76, %p77
      %p79 = scmp.ne.s32.totalorder %s71, %s73
      %p80 = scmp.eq.s32.totalorder %s21, 1
      %p81 = por %p79, %p80
      %p82 = scmp.ne.s32.totalorder %s73, %s74
      %p83 = scmp.eq.s32.totalorder %s21, 0
      %p84 = por %p82, %p83
      %p85 = scmp.ne.s32.totalorder %s73, %s74
      %p86 = scmp.eq.s32.totalorder %s22, 1
      %p87 = por %p85, %p86
      %p89 = scmp.ne.s32.totalorder %s74, %s88
      %p90 = scmp.eq.s32.totalorder %s22, 0
      %p91 = por %p89, %p90
      %s93 = sadd.s32 %s92, 1
      %p96 = scmp.eq.s32.totalorder %s16, 1
      %p97 = scmp.ne.s32.totalorder %s92, %s94
      %p98 = scmp.eq.s32.totalorder %s16, 0
      %p99 = por %p97, %p98
      %p100 = scmp.ne.s32.totalorder %s92, %s94
      %p101 = scmp.eq.s32.totalorder %s21, 1
      %p102 = por %p100, %p101
      %p103 = scmp.ne.s32.totalorder %s94, %s95
      %p104 = scmp.eq.s32.totalorder %s21, 0
      %p105 = por %p103, %p104
      %p106 = scmp.ne.s32.totalorder %s94, %s95
      %p107 = scmp.eq.s32.totalorder %s22, 1
      %p108 = por %p106, %p107
      %p110 = scmp.ne.s32.totalorder %s95, %s109
      %p111 = scmp.eq.s32.totalorder %s22, 0
      %p112 = por %p110, %p111
      %s114 = sadd.s32 %s113, 1
      %p117 = scmp.eq.s32.totalorder %s16, 1
      %p118 = scmp.ne.s32.totalorder %s113, %s115
      %p119 = scmp.eq.s32.totalorder %s16, 0
      %p120 = por %p118, %p119
      %p121 = scmp.ne.s32.totalorder %s113, %s115
      %p122 = scmp.eq.s32.totalorder %s21, 1
      %p123 = por %p121, %p122
      %p124 = scmp.ne.s32.totalorder %s115, %s116
      %p125 = scmp.eq.s32.totalorder %s21, 0
      %p126 = por %p124, %p125
      %p127 = scmp.ne.s32.totalorder %s115, %s116
      %p128 = scmp.eq.s32.totalorder %s22, 1
      %p129 = por %p127, %p128
      %p131 = scmp.ne.s32.totalorder %s116, %s130
      %p132 = scmp.eq.s32.totalorder %s22, 0
      %p133 = por %p131, %p132
      %s135 = sadd.s32 %s134, 1
      %p138 = scmp.eq.s32.totalorder %s16, 1
      %p139 = scmp.ne.s32.totalorder %s134, %s136
      %p140 = scmp.eq.s32.totalorder %s16, 0
      %p141 = por %p139, %p140
      %p142 = scmp.ne.s32.totalorder %s134, %s136
      %p143 = scmp.eq.s32.totalorder %s21, 1
      %p144 = por %p142, %p143
      %p145 = scmp.ne.s32.totalorder %s136, %s137
      %p146 = scmp.eq.s32.totalorder %s21, 0
      %p147 = por %p145, %p146
      %p148 = scmp.ne.s32.totalorder %s136, %s137
      %p149 = scmp.eq.s32.totalorder %s22, 1
      %p150 = por %p148, %p149
      %p152 = scmp.ne.s32.totalorder %s137, %s151
      %p153 = scmp.eq.s32.totalorder %s22, 0
      %p154 = por %p152, %p153
      %s156 = sadd.s32 %s155, 1
      %p159 = scmp.eq.s32.totalorder %s16, 1
      %p160 = scmp.ne.s32.totalorder %s155, %s157
      %p161 = scmp.eq.s32.totalorder %s16, 0
      %p162 = por %p160, %p161
      %p163 = scmp.ne.s32.totalorder %s155, %s157
      %p164 = scmp.eq.s32.totalorder %s21, 1
      %p165 = por %p163, %p164
      %p166 = scmp.ne.s32.totalorder %s157, %s158
      %p167 = scmp.eq.s32.totalorder %s21, 0
      %p168 = por %p166, %p167
      %p169 = scmp.ne.s32.totalorder %s157, %s158
      %p170 = scmp.eq.s32.totalorder %s22, 1
      %p171 = por %p169, %p170
      %p173 = scmp.ne.s32.totalorder %s158, %s172
      %p174 = scmp.eq.s32.totalorder %s22, 0
      %p175 = por %p173, %p174
      %s176 = ssub.s32 %s16, %s23
      %p177 = scmp.eq.s32.totalorder %s176, 0
      %s179 = sadd.s32 %s178, 1
      %s180 = scalar_select %p177, %s178, %s179
      %p183 = pneg %p177
      %p184 = scmp.eq.s32.totalorder %s16, 1
      %p185 = por %p183, %p184
      %p186 = scmp.ne.s32.totalorder %s178, %s181
      %p187 = scmp.eq.s32.totalorder %s16, 0
      %p188 = por %p186, %p187
      %p189 = scmp.ne.s32.totalorder %s178, %s181
      %p190 = scmp.eq.s32.totalorder %s21, 1
      %p191 = por %p189, %p190
      %p192 = scmp.ne.s32.totalorder %s181, %s182
      %p193 = scmp.eq.s32.totalorder %s21, 0
      %p194 = por %p192, %p193
      %p195 = scmp.ne.s32.totalorder %s181, %s182
      %p196 = scmp.eq.s32.totalorder %s22, 1
      %p197 = por %p195, %p196
      %p199 = scmp.ne.s32.totalorder %s182, %s198
      %p200 = scmp.eq.s32.totalorder %s22, 0
      %p201 = por %p199, %p200
      %p202 = scmp.le.s32.totalorder 1, %s16
      %p203 = scmp.lt.s32.totalorder %s16, 3
      %p204 = pnand %p202, %p203
      %p205 = pneg %p204
      // Predicated region
      $region9: #{tpu_custom_call.1} parent=5 // pred_check
        _
      $region10: #{tpu_custom_call.1} parent=5 // pred_check_branch
        %207 = sbr.rel (%p204) target = $region12
      $region11: #{tpu_custom_call.1} parent=5 // pred_region
        %s208 = ssub.s32 %s16, 1
        // Predicated region
        $region13: #{tpu_custom_call.1} parent=11 // pred_check
          %p209 = pneg %p63
        $region14: #{tpu_custom_call.1} parent=11 // pred_check_branch
          %211 = sbr.rel (%p209) target = $region16
        $region15: #{tpu_custom_call.1} parent=11 // pred_region
          _
        $region16: #{tpu_custom_call.1} parent=11 // pred_fallthru
          _
        // Predicated region
        $region17: #{tpu_custom_call.1} parent=11 // pred_check
          %p212 = pneg %p84
        $region18: #{tpu_custom_call.1} parent=11 // pred_check_branch
          %214 = sbr.rel (%p212) target = $region20
        $region19: #{tpu_custom_call.1} parent=11 // pred_region
          _
        $region20: #{tpu_custom_call.1} parent=11 // pred_fallthru
          _
        // Predicated region
        $region21: #{tpu_custom_call.1} parent=11 // pred_check
          %p215 = pneg %p105
        $region22: #{tpu_custom_call.1} parent=11 // pred_check_branch
          %217 = sbr.rel (%p215) target = $region24
        $region23: #{tpu_custom_call.1} parent=11 // pred_region
          _
        $region24: #{tpu_custom_call.1} parent=11 // pred_fallthru
          _
        // Predicated region
        $region25: #{tpu_custom_call.1} parent=11 // pred_check
          %p218 = pneg %p126
        $region26: #{tpu_custom_call.1} parent=11 // pred_check_branch
          %220 = sbr.rel (%p218) target = $region28
        $region27: #{tpu_custom_call.1} parent=11 // pred_region
          _
        $region28: #{tpu_custom_call.1} parent=11 // pred_fallthru
          _
        // Predicated region
        $region29: #{tpu_custom_call.1} parent=11 // pred_check
          %p221 = pneg %p147
        $region30: #{tpu_custom_call.1} parent=11 // pred_check_branch
          %223 = sbr.rel (%p221) target = $region32
        $region31: #{tpu_custom_call.1} parent=11 // pred_region
          _
        $region32: #{tpu_custom_call.1} parent=11 // pred_fallthru
          _
        // Predicated region
        $region33: #{tpu_custom_call.1} parent=11 // pred_check
          %p224 = pneg %p168
        $region34: #{tpu_custom_call.1} parent=11 // pred_check_branch
          %226 = sbr.rel (%p224) target = $region36
        $region35: #{tpu_custom_call.1} parent=11 // pred_region
          _
        $region36: #{tpu_custom_call.1} parent=11 // pred_fallthru
          _
      $region12: #{tpu_custom_call.1} parent=5 // pred_fallthru
        _
      %p227 = scmp.lt.s32.totalorder %s16, 2
      // Predicated region
      $region37: #{tpu_custom_call.1} parent=5 // pred_check
        %p228 = pneg %p227
      $region38: #{tpu_custom_call.1} parent=5 // pred_check_branch
        %230 = sbr.rel (%p228) target = $region40
      $region39: #{tpu_custom_call.1} parent=5 // pred_region
        // Predicated region
        $region41: #{tpu_custom_call.1} parent=39 // pred_check
          %p231 = pneg %p36
        $region42: #{tpu_custom_call.1} parent=39 // pred_check_branch
          %233 = sbr.rel (%p231) target = $region44
        $region43: #{tpu_custom_call.1} parent=39 // pred_region
          %p234 = scmp.lt.s32.totalorder %s16, 1
          %s235 = scalar_select %p234, %s16, 1
          %s236 = smul.addr %s235, 2
          %s237 = smul.addr %s236, 4
          %s238 = scalar_lea.vmem %s0, %s237
        $region44: #{tpu_custom_call.1} parent=39 // pred_fallthru
          _
      $region40: #{tpu_custom_call.1} parent=5 // pred_fallthru
        _
      %p239 = scmp.le.s32.totalorder 1, %s16
      %p240 = scmp.lt.s32.totalorder %s16, 3
      %p241 = pnand %p239, %p240
      %p242 = pneg %p241
      // Predicated region
      $region45: #{tpu_custom_call.1} parent=5 // pred_check
        _
      $region46: #{tpu_custom_call.1} parent=5 // pred_check_branch
        %244 = sbr.rel (%p241) target = $region48
      $region47: #{tpu_custom_call.1} parent=5 // pred_region
        %s245 = ssub.s32 %s16, 1
        %p246 = scmp.lt.s32.totalorder %s21, 1
        %s247 = scalar_select %p246, %s21, 1
        %s248 = smul.addr %s247, 2
        %s249 = smul.addr %s248, 4
        %s250 = scalar_lea.vmem %s0, %s249
        %p251 = pneg %p42
        %p252 = pneg %p39
        %p253 = pneg %p63
        %p254 = pneg %p60
        %p255 = pneg %p84
        %p256 = pneg %p81
        %p257 = pneg %p105
        %p258 = pneg %p102
        %p259 = pneg %p126
        %p260 = pneg %p123
        %p261 = pneg %p147
        %p262 = pneg %p144
        %p263 = pneg %p168
        %p264 = pneg %p165
        %p265 = pneg %p194
        %p266 = pneg %p191
        %s267 = sand.u32 %s181, 1
        %s268 = scalar_lea.sflag [#allocation5], %s267
        %s269 = sand.u32 %s181, 1
        %s270 = smul.addr %s269, 16
        %s271 = scalar_lea.vmem [#allocation4], %s270
        %p272 = scmp.lt.s32.totalorder %s21, 1
        %s273 = scalar_select %p272, %s21, 1
        %s274 = smul.addr %s273, 2
        %s275 = smul.addr %s274, 4
        %s276 = scalar_lea.vmem %s0, %s275
        %277 = vst [vmem:[#allocation2] sm:$0xff] 0.0
        %vm278 = vcmask 568320
        %279 = vst.msk [vmem:[#allocation2 + $0x8] sm:$0xf] %vm278, 0.0
        %v280 = vld [vmem:[%s276] sm:$0xf]
        %282 = vrot.lane.b32.xlu0 %v280, 19
        %v283 = vpop.permute.xlu0 %282
        %vm285 = vcmask 281752
        %286 = vst.msk [vmem:[#allocation2] sm:$0xf] %vm285, %v283
        %v287 = vld [vmem:[%s276] sm:$0xf]
        %289 = vrot.lane.b32.xlu0 %v287, 21
        %v290 = vpop.permute.xlu0 %289
        %vm292 = vcmask 429352
        %293 = vst.msk [vmem:[#allocation2] sm:$0xf] %vm292, %v290
        %v294 = vld [vmem:[%s276] sm:$0xf]
        %296 = vrot.lane.b32.xlu0 %v294, 23
        %v297 = vpop.permute.xlu0 %296
        %vm299 = vcmask 576952
        %300 = vst.msk [vmem:[#allocation2] sm:$0xf] %vm299, %v297
        %v301 = vld [vmem:[%s276] sm:$0xf]
        %303 = vrot.lane.b32.xlu0 %v301, 25
        %v304 = vpop.permute.xlu0 %303
        %vm306 = vcmask 724552
        %307 = vst.msk [vmem:[#allocation2] sm:$0xf] %vm306, %v304
        %v308 = vld [vmem:[%s276] sm:$0xf]
        %310 = vrot.lane.b32.xlu0 %v308, 27
        %v311 = vpop.permute.xlu0 %310
        %vm313 = vcmask 872152
        %314 = vst.msk [vmem:[#allocation2] sm:$0xf] %vm313, %v311
        %v315 = vld [vmem:[%s276] sm:$0xf]
        %317 = vrot.lane.b32.xlu0 %v315, 29
        %v318 = vpop.permute.xlu0 %317
        %vm320 = vcmask 1019752
        %321 = vst.msk [vmem:[#allocation2] sm:$0xf] %vm320, %v318
        %v322 = vld [vmem:[%s276] sm:$0xf]
        %324 = vrot.lane.b32.xlu0 %v322, 31
        %v325 = vpop.permute.xlu0 %324
        %v326 = vrot.slane %v325, 4
        %vm327 = vcmask 252928
        %v328 = vsel %vm327, %v326, %v325
        %vm330 = vcmask 1044472
        %vm331 = vcmask 121860
        %vm332 = vmor %vm331, %vm330
        %333 = vst.msk [vmem:[#allocation2] sm:$0xff] %vm332, %v328
        %v334 = vld [vmem:[%s276] sm:$0xf]
        %336 = vrot.lane.b32.xlu0 %v334, 33
        %v337 = vpop.permute.xlu0 %336
        %vm339 = vcmask 265352
        %340 = vst.msk [vmem:[#allocation2 + $0x4] sm:$0xf] %vm339, %v337
        %v341 = vld [vmem:[%s276 + $0x4] sm:$0xf]
        %343 = vrot.lane.b32.xlu0 %v341, 35
        %v344 = vpop.permute.xlu0 %343
        %vm346 = vcmask 412952
        %347 = vst.msk [vmem:[#allocation2 + $0x4] sm:$0xf] %vm346, %v344
        %v348 = vld [vmem:[%s276 + $0x4] sm:$0xf]
        %350 = vrot.lane.b32.xlu0 %v348, 37
        %v351 = vpop.permute.xlu0 %350
        %vm353 = vcmask 560552
        %354 = vst.msk [vmem:[#allocation2 + $0x4] sm:$0xf] %vm353, %v351
        %v355 = vld [vmem:[%s276 + $0x4] sm:$0xf]
        %357 = vrot.lane.b32.xlu0 %v355, 39
        %v358 = vpop.permute.xlu0 %357
        %vm360 = vcmask 708152
        %361 = vst.msk [vmem:[#allocation2 + $0x4] sm:$0xf] %vm360, %v358
        %v362 = vld [vmem:[%s276 + $0x4] sm:$0xf]
        %364 = vrot.lane.b32.xlu0 %v362, 41
        %v365 = vpop.permute.xlu0 %364
        %vm367 = vcmask 855752
        %368 = vst.msk [vmem:[#allocation2 + $0x4] sm:$0xf] %vm367, %v365
        %v369 = vld [vmem:[%s276 + $0x4] sm:$0xf]
        %371 = vrot.lane.b32.xlu0 %v369, 43
        %v372 = vpop.permute.xlu0 %371
        %vm374 = vcmask 1003352
        %375 = vst.msk [vmem:[#allocation2 + $0x4] sm:$0xf] %vm374, %v372
        %v376 = vld [vmem:[%s276 + $0x4] sm:$0xf]
        %378 = vrot.lane.b32.xlu0 %v376, 45
        %v379 = vpop.permute.xlu0 %378
        %v380 = vrot.slane %v379, 4
        %vm381 = vcmask 367616
        %v382 = vsel %vm381, %v380, %v379
        %vm384 = vcmask 1044456
        %vm385 = vcmask 105476
        %vm386 = vmor %vm385, %vm384
        %387 = vst.msk [vmem:[#allocation2 + $0x4] sm:$0xff] %vm386, %v382
        %v388 = vld [vmem:[%s276 + $0x4] sm:$0xf]
        %390 = vrot.lane.b32.xlu0 %v388, 47
        %v391 = vpop.permute.xlu0 %390
        %vm393 = vcmask 248952
        %394 = vst.msk [vmem:[#allocation2 + $0x8] sm:$0xf] %vm393, %v391
        %v395 = vld [vmem:[%s276 + $0x4] sm:$0xf]
        %397 = vrot.lane.b32.xlu0 %v395, 49
        %v398 = vpop.permute.xlu0 %397
        %vm400 = vcmask 396552
        %401 = vst.msk [vmem:[#allocation2 + $0x8] sm:$0xf] %vm400, %v398
        %402 = vst [vmem:[#allocation3] sm:$0xff] 0.0
        %403 = vst [vmem:[#allocation3 + $0x8] sm:$0xff] 0.0
        %vm404 = vcmask 261120
        %405 = vst.msk [vmem:[#allocation3 + $0x10] sm:$0xff] %vm404, 0.0
        %406 = vst [vmem:[#allocation3 + $0x18] sm:$0xff] 0.0
        %407 = vst [vmem:[#allocation3 + $0x20] sm:$0xff] 0.0
        %408 = vst.msk [vmem:[#allocation3 + $0x28] sm:$0xff] %vm404, 0.0
        %409 = vst [vmem:[#allocation3 + $0x30] sm:$0xff] 0.0
        %410 = vst [vmem:[#allocation3 + $0x38] sm:$0xff] 0.0
        %411 = vst.msk [vmem:[#allocation3 + $0x40] sm:$0xff] %vm404, 0.0
        %412 = vst [vmem:[#allocation3 + $0x48] sm:$0xff] 0.0
        %413 = vst [vmem:[#allocation3 + $0x50] sm:$0xff] 0.0
        %414 = vst.msk [vmem:[#allocation3 + $0x58] sm:$0xff] %vm404, 0.0
        %415 = vst [vmem:[#allocation3 + $0x60] sm:$0xff] 0.0
        %416 = vst [vmem:[#allocation3 + $0x68] sm:$0xff] 0.0
        %417 = vst.msk [vmem:[#allocation3 + $0x70] sm:$0xff] %vm404, 0.0
        %418 = vst [vmem:[#allocation3 + $0x78] sm:$0xff] 0.0
        %419 = vst [vmem:[#allocation3 + $0x80] sm:$0xff] 0.0
        %420 = vst.msk [vmem:[#allocation3 + $0x88] sm:$0xff] %vm404, 0.0
        %421 = vst [vmem:[#allocation3 + $0x90] sm:$0xff] 0.0
        %422 = vst [vmem:[#allocation3 + $0x98] sm:$0xff] 0.0
        %423 = vst.msk [vmem:[#allocation3 + $0xa0] sm:$0xff] %vm404, 0.0
        %424 = vst [vmem:[#allocation3 + $0xa8] sm:$0xff] 0.0
        %425 = vst [vmem:[#allocation3 + $0xb0] sm:$0xff] 0.0
        %426 = vst.msk [vmem:[#allocation3 + $0xb8] sm:$0xff] %vm404, 0.0
        %427 = vst [vmem:[#allocation3 + $0xc0] sm:$0xff] 0.0
        %428 = vst [vmem:[#allocation3 + $0xc8] sm:$0xff] 0.0
        %429 = vst.msk [vmem:[#allocation3 + $0xd0] sm:$0xff] %vm404, 0.0
        %v430 = vld [vmem:[#allocation2] sm:$0xff]
        %v431 = vld [vmem:[#allocation2 + $0x8] sm:$0xf]
        %v433 = vcombine.high %v430, %v430
        %435 = vst [vmem:[#allocation3] sm:$0xf] %v430
        %436 = vst [vmem:[#allocation3 + $0x8] sm:$0xf] %v433
        %vm437 = vcmask 257024
        %438 = vst.msk [vmem:[#allocation3 + $0x10] sm:$0xf] %vm437, %v431
        %v439 = vld [vmem:[#allocation2] sm:$0xff]
        %v440 = vld [vmem:[#allocation2 + $0x8] sm:$0xf]
        %v443 = vcombine.high %v439, %v439
        %444 = vrot.lane.b32.xlu0 %v439, 127
        %v445 = vpop.permute.xlu0 %444
        %446 = vrot.lane.b32.xlu0 %v443, 127
        %v447 = vpop.permute.xlu0 %446
        %448 = vrot.lane.b32.xlu0 %v440, 127
        %v449 = vpop.permute.xlu0 %448
        %vm450 = vcmask 1039360
        %v451 = vsel %vm450, %v445, %v447
        %v452 = vsel %vm450, %v447, %v449
        %456 = vst [vmem:[#allocation3 + $0x18] sm:$0xf] %v451
        %457 = vst [vmem:[#allocation3 + $0x20] sm:$0xf] %v452
        %458 = vst.msk [vmem:[#allocation3 + $0x28] sm:$0xf] %vm437, %v449
        %v459 = vld [vmem:[#allocation2] sm:$0xff]
        %v460 = vld [vmem:[#allocation2 + $0x8] sm:$0xf]
        %v463 = vcombine.high %v459, %v459
        %464 = vrot.lane.b32.xlu0 %v459, 126
        %v465 = vpop.permute.xlu0 %464
        %466 = vrot.lane.b32.xlu0 %v463, 126
        %v467 = vpop.permute.xlu0 %466
        %468 = vrot.lane.b32.xlu0 %v460, 126
        %v469 = vpop.permute.xlu0 %468
        %vm470 = vcmask 1031168
        %v471 = vsel %vm470, %v465, %v467
        %v472 = vsel %vm470, %v467, %v469
        %476 = vst [vmem:[#allocation3 + $0x30] sm:$0xf] %v471
        %477 = vst [vmem:[#allocation3 + $0x38] sm:$0xf] %v472
        %478 = vst.msk [vmem:[#allocation3 + $0x40] sm:$0xf] %vm437, %v469
        %v479 = vld [vmem:[#allocation2] sm:$0xff]
        %v480 = vld [vmem:[#allocation2 + $0x8] sm:$0xf]
        %v483 = vcombine.high %v479, %v479
        %484 = vrot.lane.b32.xlu0 %v479, 110
        %v485 = vpop.permute.xlu0 %484
        %486 = vrot.lane.b32.xlu0 %v483, 110
        %v487 = vpop.permute.xlu0 %486
        %488 = vrot.lane.b32.xlu0 %v480, 110
        %v489 = vpop.permute.xlu0 %488
        %vm490 = vcmask 900096
        %v491 = vsel %vm490, %v485, %v487
        %v492 = vsel %vm490, %v487, %v489
        %496 = vst [vmem:[#allocation3 + $0x48] sm:$0xf] %v491
        %497 = vst [vmem:[#allocation3 + $0x50] sm:$0xf] %v492
        %498 = vst.msk [vmem:[#allocation3 + $0x58] sm:$0xf] %vm437, %v489
        %v499 = vld [vmem:[#allocation2] sm:$0xff]
        %v500 = vld [vmem:[#allocation2 + $0x8] sm:$0xf]
        %v503 = vcombine.high %v499, %v499
        %504 = vrot.lane.b32.xlu0 %v499, 109
        %v505 = vpop.permute.xlu0 %504
        %506 = vrot.lane.b32.xlu0 %v503, 109
        %v507 = vpop.permute.xlu0 %506
        %508 = vrot.lane.b32.xlu0 %v500, 109
        %v509 = vpop.permute.xlu0 %508
        %vm510 = vcmask 891904
        %v511 = vsel %vm510, %v505, %v507
        %v512 = vsel %vm510, %v507, %v509
        %516 = vst [vmem:[#allocation3 + $0x60] sm:$0xf] %v511
        %517 = vst [vmem:[#allocation3 + $0x68] sm:$0xf] %v512
        %518 = vst.msk [vmem:[#allocation3 + $0x70] sm:$0xf] %vm437, %v509
        %v519 = vld [vmem:[#allocation2] sm:$0xff]
        %v520 = vld [vmem:[#allocation2 + $0x8] sm:$0xf]
        %v523 = vcombine.high %v519, %v519
        %524 = vrot.lane.b32.xlu0 %v519, 108
        %v525 = vpop.permute.xlu0 %524
        %526 = vrot.lane.b32.xlu0 %v523, 108
        %v527 = vpop.permute.xlu0 %526
        %528 = vrot.lane.b32.xlu0 %v520, 108
        %v529 = vpop.permute.xlu0 %528
        %vm530 = vcmask 883712
        %v531 = vsel %vm530, %v525, %v527
        %v532 = vsel %vm530, %v527, %v529
        %536 = vst [vmem:[#allocation3 + $0x78] sm:$0xf] %v531
        %537 = vst [vmem:[#allocation3 + $0x80] sm:$0xf] %v532
        %538 = vst.msk [vmem:[#allocation3 + $0x88] sm:$0xf] %vm437, %v529
        %v539 = vld [vmem:[#allocation2] sm:$0xff]
        %v540 = vld [vmem:[#allocation2 + $0x8] sm:$0xf]
        %v543 = vcombine.high %v539, %v539
        %544 = vrot.lane.b32.xlu0 %v539, 92
        %v545 = vpop.permute.xlu0 %544
        %546 = vrot.lane.b32.xlu0 %v543, 92
        %v547 = vpop.permute.xlu0 %546
        %548 = vrot.lane.b32.xlu0 %v540, 92
        %v549 = vpop.permute.xlu0 %548
        %vm550 = vcmask 752640
        %v551 = vsel %vm550, %v545, %v547
        %v552 = vsel %vm550, %v547, %v549
        %556 = vst [vmem:[#allocation3 + $0x90] sm:$0xf] %v551
        %557 = vst [vmem:[#allocation3 + $0x98] sm:$0xf] %v552
        %558 = vst.msk [vmem:[#allocation3 + $0xa0] sm:$0xf] %vm437, %v549
        %v559 = vld [vmem:[#allocation2] sm:$0xff]
        %v560 = vld [vmem:[#allocation2 + $0x8] sm:$0xf]
        %v563 = vcombine.high %v559, %v559
        %564 = vrot.lane.b32.xlu0 %v559, 91
        %v565 = vpop.permute.xlu0 %564
        %566 = vrot.lane.b32.xlu0 %v563, 91
        %v567 = vpop.permute.xlu0 %566
        %568 = vrot.lane.b32.xlu0 %v560, 91
        %v569 = vpop.permute.xlu0 %568
        %vm570 = vcmask 744448
        %v571 = vsel %vm570, %v565, %v567
        %v572 = vsel %vm570, %v567, %v569
        %576 = vst [vmem:[#allocation3 + $0xa8] sm:$0xf] %v571
        %577 = vst [vmem:[#allocation3 + $0xb0] sm:$0xf] %v572
        %578 = vst.msk [vmem:[#allocation3 + $0xb8] sm:$0xf] %vm437, %v569
        %v579 = vld [vmem:[#allocation2] sm:$0xff]
        %v580 = vld [vmem:[#allocation2 + $0x8] sm:$0xf]
        %v583 = vcombine.high %v579, %v579
        %584 = vrot.lane.b32.xlu0 %v579, 90
        %v585 = vpop.permute.xlu0 %584
        %586 = vrot.lane.b32.xlu0 %v583, 90
        %v587 = vpop.permute.xlu0 %586
        %588 = vrot.lane.b32.xlu0 %v580, 90
        %v589 = vpop.permute.xlu0 %588
        %vm590 = vcmask 736256
        %v591 = vsel %vm590, %v585, %v587
        %v592 = vsel %vm590, %v587, %v589
        %596 = vst [vmem:[#allocation3 + $0xc0] sm:$0xf] %v591
        %597 = vst [vmem:[#allocation3 + $0xc8] sm:$0xf] %v592
        %598 = vst.msk [vmem:[#allocation3 + $0xd0] sm:$0xf] %vm437, %v589
        %v599 = vld [vmem:[%s1] sm:$0xff]
        %v600 = vld [vmem:[#allocation3] sm:$0xff]
        %v601 = vld [vmem:[#allocation3 + $0x8] sm:$0xff]
        %v602 = vld [vmem:[#allocation3 + $0x10] sm:$0xff]
        %v603 = vld [vmem:[#allocation3 + $0x18] sm:$0xff]
        %v604 = vld [vmem:[#allocation3 + $0x20] sm:$0xff]
        %v605 = vld [vmem:[#allocation3 + $0x28] sm:$0xff]
        %v606 = vld [vmem:[#allocation3 + $0x30] sm:$0xff]
        %v607 = vld [vmem:[#allocation3 + $0x38] sm:$0xff]
        %v608 = vld [vmem:[#allocation3 + $0x40] sm:$0xff]
        %v609 = vld [vmem:[#allocation3 + $0x48] sm:$0xff]
        %v610 = vld [vmem:[#allocation3 + $0x50] sm:$0xff]
        %v611 = vld [vmem:[#allocation3 + $0x58] sm:$0xff]
        %v612 = vld [vmem:[#allocation3 + $0x60] sm:$0xff]
        %v613 = vld [vmem:[#allocation3 + $0x68] sm:$0xff]
        %v614 = vld [vmem:[#allocation3 + $0x70] sm:$0xff]
        %v615 = vld [vmem:[#allocation3 + $0x78] sm:$0xff]
        %v616 = vld [vmem:[#allocation3 + $0x80] sm:$0xff]
        %v617 = vld [vmem:[#allocation3 + $0x88] sm:$0xff]
        %v618 = vld [vmem:[#allocation3 + $0x90] sm:$0xff]
        %v619 = vld [vmem:[#allocation3 + $0x98] sm:$0xff]
        %v620 = vld [vmem:[#allocation3 + $0xa0] sm:$0xff]
        %v621 = vld [vmem:[#allocation3 + $0xa8] sm:$0xff]
        %v622 = vld [vmem:[#allocation3 + $0xb0] sm:$0xff]
        %v623 = vld [vmem:[#allocation3 + $0xb8] sm:$0xff]
        %v624 = vld [vmem:[#allocation3 + $0xc0] sm:$0xff]
        %v625 = vld [vmem:[#allocation3 + $0xc8] sm:$0xff]
        %v626 = vld [vmem:[#allocation3 + $0xd0] sm:$0xff]
        %v627 = vld [vmem:[%s5] sm:$0xff]
        %629 = vset.pattern.permute.xlu0 0
        %630 = vperm.xlu0 %629, %v627
        %v631 = vpop.permute.xlu0 %630
        %vm633 = vcmask 588800
        %v635 = vsel %vm633, %v599, 0
        %637 = vmatprep.subr.mxu0 %v601
        %638 = vmatpush1.msra.mxu0 %v600
        %639 = vmatprep.subr.mxu0 %v604
        %640 = vmatpush1.msra.mxu0 %v603
        %641 = vmatprep.subr.mxu0 %v607
        %642 = vmatpush1.msra.mxu0 %v606
        %643 = vmatprep.subr.mxu0 %v610
        %644 = vmatpush1.msra.mxu0 %v609
        %645 = vmatprep.subr.mxu0 %v613
        %646 = vmatpush1.msra.mxu0 %v612
        %647 = vmatprep.subr.mxu0 %v616
        %648 = vmatpush1.msra.mxu0 %v615
        %649 = vmatprep.subr.mxu0 %v619
        %650 = vmatpush1.msra.mxu0 %v618
        %651 = vmatprep.subr.mxu0 %v622
        %652 = vmatpush1.msra.mxu0 %v621
        %653 = vmatprep.subr.mxu0 %v625
        %654 = vmatpush1.msra.mxu0 %v624
        %655 = vmatprep.subr.mxu0 0.0
        %656 = vmatpush1.msra.mxu0 0.0
        %657 = vmatprep.subr.mxu0 0.0
        %658 = vmatpush1.msra.mxu0 0.0
        %659 = vmatprep.subr.mxu0 0.0
        %660 = vmatpush1.msra.mxu0 0.0
        %661 = vmatprep.subr.mxu0 0.0
        %662 = vmatpush1.msra.mxu0 0.0
        %663 = vmatprep.subr.mxu0 0.0
        %664 = vmatpush1.msra.mxu0 0.0
        %665 = vmatprep.subr.mxu0 0.0
        %666 = vmatpush1.msra.mxu0 0.0
        %667 = vmatprep.subr.mxu0 0.0
        %668 = vmatpush1.msra.mxu0 0.0
        %669 = vmatprep.subr.mxu0 0.0
        %670 = vmatpush1.msra.mxu0 0.0
        %671 = vmatprep.subr.mxu0 0.0
        %672 = vmatpush1.msra.mxu0 0.0
        %673 = vmatprep.subr.mxu0 0.0
        %674 = vmatpush1.msra.mxu0 0.0
        %675 = vmatprep.subr.mxu0 0.0
        %676 = vmatpush1.msra.mxu0 0.0
        %677 = vmatprep.subr.mxu0 0.0
        %678 = vmatpush1.msra.mxu0 0.0
        %679 = vmatprep.subr.mxu0 0.0
        %680 = vmatpush1.msra.mxu0 0.0
        %681 = vmatprep.subr.mxu0 0.0
        %682 = vmatpush1.msra.mxu0 0.0
        %683 = vmatprep.subr.mxu0 0.0
        %684 = vmatpush1.msra.mxu0 0.0
        %685 = vmatprep.subr.mxu0 0.0
        %686 = vmatpush1.msra.mxu0 0.0
        %687 = vmatprep.subr.mxu0 0.0
        %688 = vmatpush1.msra.mxu0 0.0
        %689 = vmatprep.subr.mxu0 0.0
        %690 = vmatpush1.msra.mxu0 0.0
        %691 = vmatprep.subr.mxu0 0.0
        %692 = vmatpush1.msra.mxu0 0.0
        %693 = vmatprep.subr.mxu0 0.0
        %694 = vmatpush1.msra.mxu0 0.0
        %695 = vmatprep.subr.mxu0 0.0
        %696 = vmatpush1.msra.mxu0 0.0
        %697 = vmatprep.subr.mxu0 0.0
        %698 = vmatpush1.msra.mxu0 0.0
        %699 = vmatprep.subr.mxu0 0.0
        %700 = vmatpush1.msra.mxu0 0.0
        %701 = vmatprep.mubr.f32.mxu0 0.0
        %702 = vmatmul.mubr.f32.gmra.mrb[0].mxu0 %v635
        %v703 = vpop.f32.mrb[0].mxu0
        %v704 = vadd.f32 %v631, %v703
        %v705 = vpop.f32.mrb[0].mxu0
        %v706 = vadd.f32 %v631, %v705
        %707 = vdwg.mxu0
        %708 = vmatprep.subr.mxu0 0.0
        %709 = vmatpush1.msra.mxu0 %v602
        %710 = vmatprep.subr.mxu0 0.0
        %711 = vmatpush1.msra.mxu0 %v605
        %712 = vmatprep.subr.mxu0 0.0
        %713 = vmatpush1.msra.mxu0 %v608
        %714 = vmatprep.subr.mxu0 0.0
        %715 = vmatpush1.msra.mxu0 %v611
        %716 = vmatprep.subr.mxu0 0.0
        %717 = vmatpush1.msra.mxu0 %v614
        %718 = vmatprep.subr.mxu0 0.0
        %719 = vmatpush1.msra.mxu0 %v617
        %720 = vmatprep.subr.mxu0 0.0
        %721 = vmatpush1.msra.mxu0 %v620
        %722 = vmatprep.subr.mxu0 0.0
        %723 = vmatpush1.msra.mxu0 %v623
        %724 = vmatprep.subr.mxu0 0.0
        %725 = vmatpush1.msra.mxu0 %v626
        %726 = vmatprep.subr.mxu0 0.0
        %727 = vmatpush1.msra.mxu0 0.0
        %728 = vmatprep.subr.mxu0 0.0
        %729 = vmatpush1.msra.mxu0 0.0
        %730 = vmatprep.subr.mxu0 0.0
        %731 = vmatpush1.msra.mxu0 0.0
        %732 = vmatprep.subr.mxu0 0.0
        %733 = vmatpush1.msra.mxu0 0.0
        %734 = vmatprep.subr.mxu0 0.0
        %735 = vmatpush1.msra.mxu0 0.0
        %736 = vmatprep.subr.mxu0 0.0
        %737 = vmatpush1.msra.mxu0 0.0
        %738 = vmatprep.subr.mxu0 0.0
        %739 = vmatpush1.msra.mxu0 0.0
        %740 = vmatprep.subr.mxu0 0.0
        %741 = vmatpush1.msra.mxu0 0.0
        %742 = vmatprep.subr.mxu0 0.0
        %743 = vmatpush1.msra.mxu0 0.0
        %744 = vmatprep.subr.mxu0 0.0
        %745 = vmatpush1.msra.mxu0 0.0
        %746 = vmatprep.subr.mxu0 0.0
        %747 = vmatpush1.msra.mxu0 0.0
        %748 = vmatprep.subr.mxu0 0.0
        %749 = vmatpush1.msra.mxu0 0.0
        %750 = vmatprep.subr.mxu0 0.0
        %751 = vmatpush1.msra.mxu0 0.0
        %752 = vmatprep.subr.mxu0 0.0
        %753 = vmatpush1.msra.mxu0 0.0
        %754 = vmatprep.subr.mxu0 0.0
        %755 = vmatpush1.msra.mxu0 0.0
        %756 = vmatprep.subr.mxu0 0.0
        %757 = vmatpush1.msra.mxu0 0.0
        %758 = vmatprep.subr.mxu0 0.0
        %759 = vmatpush1.msra.mxu0 0.0
        %760 = vmatprep.subr.mxu0 0.0
        %761 = vmatpush1.msra.mxu0 0.0
        %762 = vmatprep.subr.mxu0 0.0
        %763 = vmatpush1.msra.mxu0 0.0
        %764 = vmatprep.subr.mxu0 0.0
        %765 = vmatpush1.msra.mxu0 0.0
        %766 = vmatprep.subr.mxu0 0.0
        %767 = vmatpush1.msra.mxu0 0.0
        %768 = vmatprep.subr.mxu0 0.0
        %769 = vmatpush1.msra.mxu0 0.0
        %770 = vmatprep.subr.mxu0 0.0
        %771 = vmatpush1.msra.mxu0 0.0
        %772 = vmatprep.mubr.f32.mxu0 0.0
        %773 = vmatmul.mubr.f32.gmra.mrb[0].mxu0 %v635
        %v774 = vpop.f32.mrb[0].mxu0
        %v775 = vadd.f32 %v631, %v774
        %v776 = vpop.f32.mrb[0].mxu0
        %777 = vdwg.mxu0
        %v778 = vmax.f32 %v704, 0.0
        %v779 = vmax.f32 %v706, 0.0
        %v780 = vmax.f32 %v775, 0.0
        %v781 = vld [vmem:[%s6] sm:$0xff]
        %v782 = vld [vmem:[%s6 + $0x8] sm:$0xff]
        %v783 = vld [vmem:[%s6 + $0x10] sm:$0xff]
        %v784 = vld [vmem:[%s6 + $0x18] sm:$0xff]
        %v785 = vld [vmem:[%s6 + $0x20] sm:$0xff]
        %v786 = vld [vmem:[%s6 + $0x28] sm:$0xff]
        %v787 = vld [vmem:[%s6 + $0x30] sm:$0xff]
        %v788 = vld [vmem:[%s6 + $0x38] sm:$0xff]
        %v789 = vld [vmem:[%s6 + $0x40] sm:$0xff]
        %v790 = vld [vmem:[%s6 + $0x48] sm:$0xff]
        %v791 = vld [vmem:[%s6 + $0x50] sm:$0xff]
        %v792 = vld [vmem:[%s6 + $0x58] sm:$0xff]
        %v793 = vld [vmem:[%s6 + $0x60] sm:$0xff]
        %v794 = vld [vmem:[%s6 + $0x68] sm:$0xff]
        %v795 = vld [vmem:[%s6 + $0x70] sm:$0xff]
        %v796 = vld [vmem:[%s6 + $0x78] sm:$0xff]
        %v797 = vld [vmem:[%s6 + $0x80] sm:$0xff]
        %v798 = vld [vmem:[%s6 + $0x88] sm:$0xff]
        %v799 = vld [vmem:[%s6 + $0x90] sm:$0xff]
        %v800 = vld [vmem:[%s6 + $0x98] sm:$0xff]
        %v801 = vld [vmem:[%s6 + $0xa0] sm:$0xff]
        %v802 = vld [vmem:[%s6 + $0xa8] sm:$0xff]
        %v803 = vld [vmem:[%s6 + $0xb0] sm:$0xff]
        %v804 = vld [vmem:[%s6 + $0xb8] sm:$0xff]
        %v805 = vld [vmem:[%s6 + $0xc0] sm:$0xff]
        %v806 = vld [vmem:[%s6 + $0xc8] sm:$0xff]
        %v807 = vld [vmem:[%s6 + $0xd0] sm:$0xff]
        %v808 = vld [vmem:[%s6 + $0xd8] sm:$0xff]
        %v809 = vld [vmem:[%s6 + $0xe0] sm:$0xff]
        %v810 = vld [vmem:[%s6 + $0xe8] sm:$0xff]
        %v811 = vld [vmem:[%s6 + $0xf0] sm:$0xff]
        %v812 = vld [vmem:[%s6 + $0xf8] sm:$0xff]
        %v813 = vld [vmem:[%s6 + $0x100] sm:$0xff]
        %v814 = vld [vmem:[%s6 + $0x108] sm:$0xff]
        %v815 = vld [vmem:[%s6 + $0x110] sm:$0xff]
        %v816 = vld [vmem:[%s6 + $0x118] sm:$0xff]
        %v818 = vsel %vm404, %v780, 0
        %820 = vmatprep.subr.mxu0 0.0
        %821 = vmatpush1.msra.mxu0 %v781
        %822 = vmatprep.subr.mxu0 0.0
        %823 = vmatpush1.msra.mxu0 %v782
        %824 = vmatprep.subr.mxu0 0.0
        %825 = vmatpush1.msra.mxu0 %v783
        %826 = vmatprep.subr.mxu0 0.0
        %827 = vmatpush1.msra.mxu0 %v784
        %828 = vmatprep.subr.mxu0 0.0
        %829 = vmatpush1.msra.mxu0 %v785
        %830 = vmatprep.subr.mxu0 0.0
        %831 = vmatpush1.msra.mxu0 %v786
        %832 = vmatprep.subr.mxu0 0.0
        %833 = vmatpush1.msra.mxu0 %v787
        %834 = vmatprep.subr.mxu0 0.0
        %835 = vmatpush1.msra.mxu0 %v788
        %836 = vmatprep.subr.mxu0 0.0
        %837 = vmatpush1.msra.mxu0 %v789
        %838 = vmatprep.subr.mxu0 0.0
        %839 = vmatpush1.msra.mxu0 %v790
        %840 = vmatprep.subr.mxu0 0.0
        %841 = vmatpush1.msra.mxu0 %v791
        %842 = vmatprep.subr.mxu0 0.0
        %843 = vmatpush1.msra.mxu0 %v792
        %844 = vmatprep.subr.mxu0 0.0
        %845 = vmatpush1.msra.mxu0 %v793
        %846 = vmatprep.subr.mxu0 0.0
        %847 = vmatpush1.msra.mxu0 %v794
        %848 = vmatprep.subr.mxu0 0.0
        %849 = vmatpush1.msra.mxu0 %v795
        %850 = vmatprep.subr.mxu0 0.0
        %851 = vmatpush1.msra.mxu0 %v796
        %852 = vmatprep.subr.mxu0 0.0
        %853 = vmatpush1.msra.mxu0 %v797
        %854 = vmatprep.subr.mxu0 0.0
        %855 = vmatpush1.msra.mxu0 %v798
        %856 = vmatprep.subr.mxu0 0.0
        %857 = vmatpush1.msra.mxu0 %v799
        %858 = vmatprep.subr.mxu0 0.0
        %859 = vmatpush1.msra.mxu0 %v800
        %860 = vmatprep.subr.mxu0 0.0
        %861 = vmatpush1.msra.mxu0 %v801
        %862 = vmatprep.subr.mxu0 0.0
        %863 = vmatpush1.msra.mxu0 %v802
        %864 = vmatprep.subr.mxu0 0.0
        %865 = vmatpush1.msra.mxu0 %v803
        %866 = vmatprep.subr.mxu0 0.0
        %867 = vmatpush1.msra.mxu0 %v804
        %868 = vmatprep.subr.mxu0 0.0
        %869 = vmatpush1.msra.mxu0 %v805
        %870 = vmatprep.subr.mxu0 0.0
        %871 = vmatpush1.msra.mxu0 %v806
        %872 = vmatprep.subr.mxu0 0.0
        %873 = vmatpush1.msra.mxu0 %v807
        %874 = vmatprep.subr.mxu0 0.0
        %875 = vmatpush1.msra.mxu0 %v808
        %876 = vmatprep.subr.mxu0 0.0
        %877 = vmatpush1.msra.mxu0 %v809
        %878 = vmatprep.subr.mxu0 0.0
        %879 = vmatpush1.msra.mxu0 %v810
        %880 = vmatprep.subr.mxu0 0.0
        %881 = vmatpush1.msra.mxu0 %v811
        %882 = vmatprep.subr.mxu0 0.0
        %883 = vmatpush1.msra.mxu0 %v812
        %884 = vmatprep.mubr.f32.mxu0 %v779
        %885 = vmatmul.mubr.f32.gmra.mrb[0].mxu0 %v778
        %v886 = vpop.f32.mrb[0].mxu0
        %v887 = vadd.f32 0.0, %v886
        %v888 = vpop.f32.mrb[0].mxu0
        %889 = vdwg.mxu0
        %890 = vmatprep.subr.mxu0 0.0
        %891 = vmatpush1.msra.mxu0 %v813
        %892 = vmatprep.subr.mxu0 0.0
        %893 = vmatpush1.msra.mxu0 %v814
        %894 = vmatprep.subr.mxu0 0.0
        %895 = vmatpush1.msra.mxu0 %v815
        %896 = vmatprep.subr.mxu0 0.0
        %897 = vmatpush1.msra.mxu0 %v816
        %898 = vmatprep.subr.mxu0 0.0
        %899 = vmatpush1.msra.mxu0 0.0
        %900 = vmatprep.subr.mxu0 0.0
        %901 = vmatpush1.msra.mxu0 0.0
        %902 = vmatprep.subr.mxu0 0.0
        %903 = vmatpush1.msra.mxu0 0.0
        %904 = vmatprep.subr.mxu0 0.0
        %905 = vmatpush1.msra.mxu0 0.0
        %906 = vmatprep.subr.mxu0 0.0
        %907 = vmatpush1.msra.mxu0 0.0
        %908 = vmatprep.subr.mxu0 0.0
        %909 = vmatpush1.msra.mxu0 0.0
        %910 = vmatprep.subr.mxu0 0.0
        %911 = vmatpush1.msra.mxu0 0.0
        %912 = vmatprep.subr.mxu0 0.0
        %913 = vmatpush1.msra.mxu0 0.0
        %914 = vmatprep.subr.mxu0 0.0
        %915 = vmatpush1.msra.mxu0 0.0
        %916 = vmatprep.subr.mxu0 0.0
        %917 = vmatpush1.msra.mxu0 0.0
        %918 = vmatprep.subr.mxu0 0.0
        %919 = vmatpush1.msra.mxu0 0.0
        %920 = vmatprep.subr.mxu0 0.0
        %921 = vmatpush1.msra.mxu0 0.0
        %922 = vmatprep.subr.mxu0 0.0
        %923 = vmatpush1.msra.mxu0 0.0
        %924 = vmatprep.subr.mxu0 0.0
        %925 = vmatpush1.msra.mxu0 0.0
        %926 = vmatprep.subr.mxu0 0.0
        %927 = vmatpush1.msra.mxu0 0.0
        %928 = vmatprep.subr.mxu0 0.0
        %929 = vmatpush1.msra.mxu0 0.0
        %930 = vmatprep.subr.mxu0 0.0
        %931 = vmatpush1.msra.mxu0 0.0
        %932 = vmatprep.subr.mxu0 0.0
        %933 = vmatpush1.msra.mxu0 0.0
        %934 = vmatprep.subr.mxu0 0.0
        %935 = vmatpush1.msra.mxu0 0.0
        %936 = vmatprep.subr.mxu0 0.0
        %937 = vmatpush1.msra.mxu0 0.0
        %938 = vmatprep.subr.mxu0 0.0
        %939 = vmatpush1.msra.mxu0 0.0
        %940 = vmatprep.subr.mxu0 0.0
        %941 = vmatpush1.msra.mxu0 0.0
        %942 = vmatprep.subr.mxu0 0.0
        %943 = vmatpush1.msra.mxu0 0.0
        %944 = vmatprep.subr.mxu0 0.0
        %945 = vmatpush1.msra.mxu0 0.0
        %946 = vmatprep.subr.mxu0 0.0
        %947 = vmatpush1.msra.mxu0 0.0
        %948 = vmatprep.subr.mxu0 0.0
        %949 = vmatpush1.msra.mxu0 0.0
        %950 = vmatprep.subr.mxu0 0.0
        %951 = vmatpush1.msra.mxu0 0.0
        %952 = vmatprep.subr.mxu0 0.0
        %953 = vmatpush1.msra.mxu0 0.0
        %954 = vmatprep.mubr.f32.mxu0 0.0
        %955 = vmatmul.mubr.f32.gmra.mrb[0].mxu0 %v818
        %v956 = vpop.f32.mrb[0].mxu0
        %v957 = vadd.f32 %v887, %v956
        %v958 = vpop.f32.mrb[0].mxu0
        %959 = vdwg.mxu0
        %v960 = vld [vmem:[%s5] sm:$0xf]
        %v961 = vld [vmem:[%s2] sm:$0xf]
        %963 = vrot.lane.b32.xlu0 %v960, 127
        %v964 = vpop.permute.xlu0 %963
        %vm966 = vcmask 64512
        %v968 = vsel %vm966, %v961, 0
        %970 = vmatprep.subr.mxu0 0.0
        %971 = vmatpush1.msra.mxu0 %v957
        %972 = vmatprep.subr.mxu0 0.0
        %973 = vmatpush1.msra.mxu0 0.0
        %974 = vmatprep.subr.mxu0 0.0
        %975 = vmatpush1.msra.mxu0 0.0
        %976 = vmatprep.subr.mxu0 0.0
        %977 = vmatpush1.msra.mxu0 0.0
        %978 = vmatprep.subr.mxu0 0.0
        %979 = vmatpush1.msra.mxu0 0.0
        %980 = vmatprep.subr.mxu0 0.0
        %981 = vmatpush1.msra.mxu0 0.0
        %982 = vmatprep.subr.mxu0 0.0
        %983 = vmatpush1.msra.mxu0 0.0
        %984 = vmatprep.subr.mxu0 0.0
        %985 = vmatpush1.msra.mxu0 0.0
        %986 = vmatprep.subr.mxu0 0.0
        %987 = vmatpush1.msra.mxu0 0.0
        %988 = vmatprep.subr.mxu0 0.0
        %989 = vmatpush1.msra.mxu0 0.0
        %990 = vmatprep.subr.mxu0 0.0
        %991 = vmatpush1.msra.mxu0 0.0
        %992 = vmatprep.subr.mxu0 0.0
        %993 = vmatpush1.msra.mxu0 0.0
        %994 = vmatprep.subr.mxu0 0.0
        %995 = vmatpush1.msra.mxu0 0.0
        %996 = vmatprep.subr.mxu0 0.0
        %997 = vmatpush1.msra.mxu0 0.0
        %998 = vmatprep.subr.mxu0 0.0
        %999 = vmatpush1.msra.mxu0 0.0
        %1000 = vmatprep.subr.mxu0 0.0
        %1001 = vmatpush1.msra.mxu0 0.0
        %1002 = vmatprep.subr.mxu0 0.0
        %1003 = vmatpush1.msra.mxu0 0.0
        %1004 = vmatprep.subr.mxu0 0.0
        %1005 = vmatpush1.msra.mxu0 0.0
        %1006 = vmatprep.subr.mxu0 0.0
        %1007 = vmatpush1.msra.mxu0 0.0
        %1008 = vmatprep.subr.mxu0 0.0
        %1009 = vmatpush1.msra.mxu0 0.0
        %1010 = vmatprep.subr.mxu0 0.0
        %1011 = vmatpush1.msra.mxu0 0.0
        %1012 = vmatprep.subr.mxu0 0.0
        %1013 = vmatpush1.msra.mxu0 0.0
        %1014 = vmatprep.subr.mxu0 0.0
        %1015 = vmatpush1.msra.mxu0 0.0
        %1016 = vmatprep.subr.mxu0 0.0
        %1017 = vmatpush1.msra.mxu0 0.0
        %1018 = vmatprep.subr.mxu0 0.0
        %1019 = vmatpush1.msra.mxu0 0.0
        %1020 = vmatprep.subr.mxu0 0.0
        %1021 = vmatpush1.msra.mxu0 0.0
        %1022 = vmatprep.subr.mxu0 0.0
        %1023 = vmatpush1.msra.mxu0 0.0
        %1024 = vmatprep.subr.mxu0 0.0
        %1025 = vmatpush1.msra.mxu0 0.0
        %1026 = vmatprep.subr.mxu0 0.0
        %1027 = vmatpush1.msra.mxu0 0.0
        %1028 = vmatprep.subr.mxu0 0.0
        %1029 = vmatpush1.msra.mxu0 0.0
        %1030 = vmatprep.subr.mxu0 0.0
        %1031 = vmatpush1.msra.mxu0 0.0
        %1032 = vmatprep.subr.mxu0 0.0
        %1033 = vmatpush1.msra.mxu0 0.0
        %1034 = vmatprep.mubr.f32.mxu0 0.0
        %1035 = vmatmul.mubr.f32.gmra.mrb[0].mxu0 %v968
        %v1036 = vpop.f32.mrb[0].mxu0
        %v1037 = vadd.f32 %v964, %v1036
        %v1038 = vpop.f32.mrb[0].mxu0
        %1039 = vdwg.mxu0
        %v1040 = vmax.f32 %v1037, 0.0
        %v1041 = vld [vmem:[%s3] sm:$0xff]
        %1042 = vrot.lane.b32.xlu0 %v627, 126
        %v1043 = vpop.permute.xlu0 %1042
        %vm1045 = vcmask 31744
        %v1047 = vsel %vm1045, %v1041, 0
        %vm1049 = vcmask 1043456
        %v1051 = vsel %vm1049, %v1040, 0
        %1053 = vmatprep.subr.mxu0 0.0
        %1054 = vmatpush1.msra.mxu0 %v1051
        %1055 = vmatprep.subr.mxu0 0.0
        %1056 = vmatpush1.msra.mxu0 0.0
        %1057 = vmatprep.subr.mxu0 0.0
        %1058 = vmatpush1.msra.mxu0 0.0
        %1059 = vmatprep.subr.mxu0 0.0
        %1060 = vmatpush1.msra.mxu0 0.0
        %1061 = vmatprep.subr.mxu0 0.0
        %1062 = vmatpush1.msra.mxu0 0.0
        %1063 = vmatprep.subr.mxu0 0.0
        %1064 = vmatpush1.msra.mxu0 0.0
        %1065 = vmatprep.subr.mxu0 0.0
        %1066 = vmatpush1.msra.mxu0 0.0
        %1067 = vmatprep.subr.mxu0 0.0
        %1068 = vmatpush1.msra.mxu0 0.0
        %1069 = vmatprep.subr.mxu0 0.0
        %1070 = vmatpush1.msra.mxu0 0.0
        %1071 = vmatprep.subr.mxu0 0.0
        %1072 = vmatpush1.msra.mxu0 0.0
        %1073 = vmatprep.subr.mxu0 0.0
        %1074 = vmatpush1.msra.mxu0 0.0
        %1075 = vmatprep.subr.mxu0 0.0
        %1076 = vmatpush1.msra.mxu0 0.0
        %1077 = vmatprep.subr.mxu0 0.0
        %1078 = vmatpush1.msra.mxu0 0.0
        %1079 = vmatprep.subr.mxu0 0.0
        %1080 = vmatpush1.msra.mxu0 0.0
        %1081 = vmatprep.subr.mxu0 0.0
        %1082 = vmatpush1.msra.mxu0 0.0
        %1083 = vmatprep.subr.mxu0 0.0
        %1084 = vmatpush1.msra.mxu0 0.0
        %1085 = vmatprep.subr.mxu0 0.0
        %1086 = vmatpush1.msra.mxu0 0.0
        %1087 = vmatprep.subr.mxu0 0.0
        %1088 = vmatpush1.msra.mxu0 0.0
        %1089 = vmatprep.subr.mxu0 0.0
        %1090 = vmatpush1.msra.mxu0 0.0
        %1091 = vmatprep.subr.mxu0 0.0
        %1092 = vmatpush1.msra.mxu0 0.0
        %1093 = vmatprep.subr.mxu0 0.0
        %1094 = vmatpush1.msra.mxu0 0.0
        %1095 = vmatprep.subr.mxu0 0.0
        %1096 = vmatpush1.msra.mxu0 0.0
        %1097 = vmatprep.subr.mxu0 0.0
        %1098 = vmatpush1.msra.mxu0 0.0
        %1099 = vmatprep.subr.mxu0 0.0
        %1100 = vmatpush1.msra.mxu0 0.0
        %1101 = vmatprep.subr.mxu0 0.0
        %1102 = vmatpush1.msra.mxu0 0.0
        %1103 = vmatprep.subr.mxu0 0.0
        %1104 = vmatpush1.msra.mxu0 0.0
        %1105 = vmatprep.subr.mxu0 0.0
        %1106 = vmatpush1.msra.mxu0 0.0
        %1107 = vmatprep.subr.mxu0 0.0
        %1108 = vmatpush1.msra.mxu0 0.0
        %1109 = vmatprep.subr.mxu0 0.0
        %1110 = vmatpush1.msra.mxu0 0.0
        %1111 = vmatprep.subr.mxu0 0.0
        %1112 = vmatpush1.msra.mxu0 0.0
        %1113 = vmatprep.subr.mxu0 0.0
        %1114 = vmatpush1.msra.mxu0 0.0
        %1115 = vmatprep.subr.mxu0 0.0
        %1116 = vmatpush1.msra.mxu0 0.0
        %1117 = vmatprep.mubr.f32.mxu0 0.0
        %1118 = vmatmul.mubr.f32.gmra.mrb[0].mxu0 %v1047
        %v1119 = vpop.f32.mrb[0].mxu0
        %v1120 = vadd.f32 %v1043, %v1119
        %v1121 = vpop.f32.mrb[0].mxu0
        %1122 = vdwg.mxu0
        %v1123 = vxor.u32 %v1120, 2147483648
        %v1124 = vmul.f32 %v1123, 1.442695
        %v1125 = vpow.pop %v1124
        %v1126 = vadd.f32 %v1125, 1.0
        %v1127 = vrcp.pop %v1126
        %v1128 = vmul.f32 1.0, %v1127
        %v1129 = vld [vmem:[%s5] sm:$0x1]
        %v1130 = vld [vmem:[%s4] sm:$0x1]
        %1132 = vset.pattern.permute.xlu0 3
        %1133 = vperm.xlu0 %1132, %v1129
        %v1134 = vpop.permute.xlu0 %1133
        %v1137 = vsel %vm966, %v1130, 0
        %1139 = vmatprep.subr.mxu0 %v779
        %1140 = vmatpush1.msra.mxu0 %v778
        %1141 = vmatprep.subr.mxu0 0.0
        %1142 = vmatpush1.msra.mxu0 0.0
        %1143 = vmatprep.subr.mxu0 0.0
        %1144 = vmatpush1.msra.mxu0 0.0
        %1145 = vmatprep.subr.mxu0 0.0
        %1146 = vmatpush1.msra.mxu0 0.0
        %1147 = vmatprep.subr.mxu0 0.0
        %1148 = vmatpush1.msra.mxu0 0.0
        %1149 = vmatprep.subr.mxu0 0.0
        %1150 = vmatpush1.msra.mxu0 0.0
        %1151 = vmatprep.subr.mxu0 0.0
        %1152 = vmatpush1.msra.mxu0 0.0
        %1153 = vmatprep.subr.mxu0 0.0
        %1154 = vmatpush1.msra.mxu0 0.0
        %1155 = vmatprep.subr.mxu0 0.0
        %1156 = vmatpush1.msra.mxu0 0.0
        %1157 = vmatprep.subr.mxu0 0.0
        %1158 = vmatpush1.msra.mxu0 0.0
        %1159 = vmatprep.subr.mxu0 0.0
        %1160 = vmatpush1.msra.mxu0 0.0
        %1161 = vmatprep.subr.mxu0 0.0
        %1162 = vmatpush1.msra.mxu0 0.0
        %1163 = vmatprep.subr.mxu0 0.0
        %1164 = vmatpush1.msra.mxu0 0.0
        %1165 = vmatprep.subr.mxu0 0.0
        %1166 = vmatpush1.msra.mxu0 0.0
        %1167 = vmatprep.subr.mxu0 0.0
        %1168 = vmatpush1.msra.mxu0 0.0
        %1169 = vmatprep.subr.mxu0 0.0
        %1170 = vmatpush1.msra.mxu0 0.0
        %1171 = vmatprep.subr.mxu0 0.0
        %1172 = vmatpush1.msra.mxu0 0.0
        %1173 = vmatprep.subr.mxu0 0.0
        %1174 = vmatpush1.msra.mxu0 0.0
        %1175 = vmatprep.subr.mxu0 0.0
        %1176 = vmatpush1.msra.mxu0 0.0
        %1177 = vmatprep.subr.mxu0 0.0
        %1178 = vmatpush1.msra.mxu0 0.0
        %1179 = vmatprep.subr.mxu0 0.0
        %1180 = vmatpush1.msra.mxu0 0.0
        %1181 = vmatprep.subr.mxu0 0.0
        %1182 = vmatpush1.msra.mxu0 0.0
        %1183 = vmatprep.subr.mxu0 0.0
        %1184 = vmatpush1.msra.mxu0 0.0
        %1185 = vmatprep.subr.mxu0 0.0
        %1186 = vmatpush1.msra.mxu0 0.0
        %1187 = vmatprep.subr.mxu0 0.0
        %1188 = vmatpush1.msra.mxu0 0.0
        %1189 = vmatprep.subr.mxu0 0.0
        %1190 = vmatpush1.msra.mxu0 0.0
        %1191 = vmatprep.subr.mxu0 0.0
        %1192 = vmatpush1.msra.mxu0 0.0
        %1193 = vmatprep.subr.mxu0 0.0
        %1194 = vmatpush1.msra.mxu0 0.0
        %1195 = vmatprep.subr.mxu0 0.0
        %1196 = vmatpush1.msra.mxu0 0.0
        %1197 = vmatprep.subr.mxu0 0.0
        %1198 = vmatpush1.msra.mxu0 0.0
        %1199 = vmatprep.subr.mxu0 0.0
        %1200 = vmatpush1.msra.mxu0 0.0
        %1201 = vmatprep.subr.mxu0 0.0
        %1202 = vmatpush1.msra.mxu0 0.0
        %1203 = vmatprep.mubr.f32.mxu0 0.0
        %1204 = vmatmul.mubr.f32.gmra.mrb[0].mxu0 %v1137
        %v1205 = vpop.f32.mrb[0].mxu0
        %v1206 = vadd.f32 %v1134, %v1205
        %v1207 = vpop.f32.mrb[0].mxu0
        %v1208 = vadd.f32 %v1134, %v1207
        %1209 = vdwg.mxu0
        %1210 = vmatprep.subr.mxu0 0.0
        %1211 = vmatpush1.msra.mxu0 %v780
        %1212 = vmatprep.subr.mxu0 0.0
        %1213 = vmatpush1.msra.mxu0 0.0
        %1214 = vmatprep.subr.mxu0 0.0
        %1215 = vmatpush1.msra.mxu0 0.0
        %1216 = vmatprep.subr.mxu0 0.0
        %1217 = vmatpush1.msra.mxu0 0.0
        %1218 = vmatprep.subr.mxu0 0.0
        %1219 = vmatpush1.msra.mxu0 0.0
        %1220 = vmatprep.subr.mxu0 0.0
        %1221 = vmatpush1.msra.mxu0 0.0
        %1222 = vmatprep.subr.mxu0 0.0
        %1223 = vmatpush1.msra.mxu0 0.0
        %1224 = vmatprep.subr.mxu0 0.0
        %1225 = vmatpush1.msra.mxu0 0.0
        %1226 = vmatprep.subr.mxu0 0.0
        %1227 = vmatpush1.msra.mxu0 0.0
        %1228 = vmatprep.subr.mxu0 0.0
        %1229 = vmatpush1.msra.mxu0 0.0
        %1230 = vmatprep.subr.mxu0 0.0
        %1231 = vmatpush1.msra.mxu0 0.0
        %1232 = vmatprep.subr.mxu0 0.0
        %1233 = vmatpush1.msra.mxu0 0.0
        %1234 = vmatprep.subr.mxu0 0.0
        %1235 = vmatpush1.msra.mxu0 0.0
        %1236 = vmatprep.subr.mxu0 0.0
        %1237 = vmatpush1.msra.mxu0 0.0
        %1238 = vmatprep.subr.mxu0 0.0
        %1239 = vmatpush1.msra.mxu0 0.0
        %1240 = vmatprep.subr.mxu0 0.0
        %1241 = vmatpush1.msra.mxu0 0.0
        %1242 = vmatprep.subr.mxu0 0.0
        %1243 = vmatpush1.msra.mxu0 0.0
        %1244 = vmatprep.subr.mxu0 0.0
        %1245 = vmatpush1.msra.mxu0 0.0
        %1246 = vmatprep.subr.mxu0 0.0
        %1247 = vmatpush1.msra.mxu0 0.0
        %1248 = vmatprep.subr.mxu0 0.0
        %1249 = vmatpush1.msra.mxu0 0.0
        %1250 = vmatprep.subr.mxu0 0.0
        %1251 = vmatpush1.msra.mxu0 0.0
        %1252 = vmatprep.subr.mxu0 0.0
        %1253 = vmatpush1.msra.mxu0 0.0
        %1254 = vmatprep.subr.mxu0 0.0
        %1255 = vmatpush1.msra.mxu0 0.0
        %1256 = vmatprep.subr.mxu0 0.0
        %1257 = vmatpush1.msra.mxu0 0.0
        %1258 = vmatprep.subr.mxu0 0.0
        %1259 = vmatpush1.msra.mxu0 0.0
        %1260 = vmatprep.subr.mxu0 0.0
        %1261 = vmatpush1.msra.mxu0 0.0
        %1262 = vmatprep.subr.mxu0 0.0
        %1263 = vmatpush1.msra.mxu0 0.0
        %1264 = vmatprep.subr.mxu0 0.0
        %1265 = vmatpush1.msra.mxu0 0.0
        %1266 = vmatprep.subr.mxu0 0.0
        %1267 = vmatpush1.msra.mxu0 0.0
        %1268 = vmatprep.subr.mxu0 0.0
        %1269 = vmatpush1.msra.mxu0 0.0
        %1270 = vmatprep.subr.mxu0 0.0
        %1271 = vmatpush1.msra.mxu0 0.0
        %1272 = vmatprep.subr.mxu0 0.0
        %1273 = vmatpush1.msra.mxu0 0.0
        %1274 = vmatprep.mubr.f32.mxu0 0.0
        %1275 = vmatmul.mubr.f32.gmra.mrb[0].mxu0 %v1137
        %v1276 = vpop.f32.mrb[0].mxu0
        %v1277 = vadd.f32 %v1134, %v1276
        %v1278 = vpop.f32.mrb[0].mxu0
        %1279 = vdwg.mxu0
        %v1280 = vxor.u32 %v1206, 2147483648
        %v1281 = vxor.u32 %v1208, 2147483648
        %v1282 = vxor.u32 %v1277, 2147483648
        %v1283 = vmul.f32 %v1280, 1.442695
        %v1284 = vpow.pop %v1283
        %v1285 = vmul.f32 %v1281, 1.442695
        %v1286 = vpow.pop %v1285
        %v1287 = vmul.f32 %v1282, 1.442695
        %v1288 = vpow.pop %v1287
        %v1289 = vadd.f32 %v1284, 1.0
        %v1290 = vadd.f32 %v1286, 1.0
        %v1291 = vadd.f32 %v1288, 1.0
        %v1292 = vrcp.pop %v1289
        %v1293 = vmul.f32 1.0, %v1292
        %v1294 = vrcp.pop %v1290
        %v1295 = vmul.f32 1.0, %v1294
        %v1296 = vrcp.pop %v1291
        %v1297 = vmul.f32 1.0, %v1296
        %1299 = vset.pattern.permute.xlu0 0
        %1300 = vperm.xlu0 %1299, %v1128
        %v1301 = vpop.permute.xlu0 %1300
        %v1303 = vlaneseq
        %v1304 = vshrl.u32 %v1303, 7
        %v1305 = vsub.s32 0, %v1304
        %v1306 = vrot.slane %v1293, %v1305
        %v1307 = vlaneseq
        %v1308 = vshrl.u32 %v1307, 7
        %v1309 = vsub.s32 0, %v1308
        %v1310 = vrot.slane %v1295, %v1309
        %v1311 = vlaneseq
        %v1312 = vshrl.u32 %v1311, 7
        %v1313 = vsub.s32 0, %v1312
        %v1314 = vrot.slane %v1297, %v1313
        %v1315 = vmax.f32 %v1301, %v1306
        %v1316 = vmax.f32 %v1301, %v1310
        %v1317 = vmax.f32 %v1301, %v1314
        %v1318 = vmul.f32 %v778, %v1315
        %v1319 = vmul.f32 %v779, %v1316
        %v1320 = vmul.f32 %v780, %v1317
        %vm1321 = vcmask 130048
        %1322 = vst.msk [vmem:[%s271] sm:$0xff] %vm1321, %v1318
        %1324 = vrot.lane.b32.xlu0 %v1318, 126
        %v1325 = vpop.permute.xlu0 %1324
        %vm1327 = vcmask 261248
        %1328 = vst.msk [vmem:[%s271] sm:$0xff] %vm1327, %v1325
        %1329 = vrot.lane.b32.xlu0 %v1318, 124
        %v1330 = vpop.permute.xlu0 %1329
        %vm1332 = vcmask 392448
        %1333 = vst.msk [vmem:[%s271] sm:$0xff] %vm1332, %v1330
        %1334 = vrot.lane.b32.xlu0 %v1318, 122
        %v1335 = vpop.permute.xlu0 %1334
        %vm1337 = vcmask 523648
        %1338 = vst.msk [vmem:[%s271] sm:$0xff] %vm1337, %v1335
        %1339 = vrot.lane.b32.xlu0 %v1318, 120
        %v1340 = vpop.permute.xlu0 %1339
        %vm1342 = vcmask 654848
        %1343 = vst.msk [vmem:[%s271] sm:$0xff] %vm1342, %v1340
        %1344 = vrot.lane.b32.xlu0 %v1318, 118
        %v1345 = vpop.permute.xlu0 %1344
        %vm1347 = vcmask 786048
        %1348 = vst.msk [vmem:[%s271] sm:$0xff] %vm1347, %v1345
        %1349 = vrot.lane.b32.xlu0 %v1318, 116
        %v1350 = vpop.permute.xlu0 %1349
        %vm1352 = vcmask 917248
        %1353 = vst.msk [vmem:[%s271] sm:$0xff] %vm1352, %v1350
        %1355 = vrot.lane.b32.xlu0 %v1318, 114
        %v1356 = vpop.permute.xlu0 %1355
        %1357 = vrot.lane.b32.xlu0 %v1319, 114
        %v1358 = vpop.permute.xlu0 %1357
        %vm1359 = vcmask 932864
        %v1360 = vsel %vm1359, %v1356, %v1358
        %vm1362 = vcmask 1048448
        %1363 = vst.msk [vmem:[%s271] sm:$0xff] %vm1362, %v1360
        %1364 = vrot.lane.b32.xlu0 %v1319, 112
        %v1365 = vpop.permute.xlu0 %1364
        %1367 = vst.msk [vmem:[%s271 + $0x8] sm:$0xff] %vm1321, %v1365
        %1368 = vrot.lane.b32.xlu0 %v1319, 110
        %v1369 = vpop.permute.xlu0 %1368
        %1371 = vst.msk [vmem:[%s271 + $0x8] sm:$0xff] %vm1327, %v1369
        %1372 = vrot.lane.b32.xlu0 %v1319, 108
        %v1373 = vpop.permute.xlu0 %1372
        %1375 = vst.msk [vmem:[%s271 + $0x8] sm:$0xff] %vm1332, %v1373
        %1376 = vrot.lane.b32.xlu0 %v1319, 106
        %v1377 = vpop.permute.xlu0 %1376
        %1379 = vst.msk [vmem:[%s271 + $0x8] sm:$0xff] %vm1337, %v1377
        %1380 = vrot.lane.b32.xlu0 %v1319, 104
        %v1381 = vpop.permute.xlu0 %1380
        %1383 = vst.msk [vmem:[%s271 + $0x8] sm:$0xff] %vm1342, %v1381
        %1384 = vrot.lane.b32.xlu0 %v1319, 102
        %v1385 = vpop.permute.xlu0 %1384
        %1387 = vst.msk [vmem:[%s271 + $0x8] sm:$0xff] %vm1347, %v1385
        %1389 = vrot.lane.b32.xlu0 %v1319, 100
        %v1390 = vpop.permute.xlu0 %1389
        %1391 = vrot.lane.b32.xlu0 %v1320, 100
        %v1392 = vpop.permute.xlu0 %1391
        %vm1393 = vcmask 818176
        %v1394 = vsel %vm1393, %v1390, %v1392
        %1396 = vst.msk [vmem:[%s271 + $0x8] sm:$0xff] %vm1352, %v1394
        %1397 = vrot.lane.b32.xlu0 %v1320, 98
        %v1398 = vpop.permute.xlu0 %1397
        %1400 = vst.msk [vmem:[%s271 + $0x8] sm:$0xff] %vm1362, %v1398
        %s1401 = sand.u32 %s181, 1
        %s1402 = scalar_lea.sflag [#allocation5], %s1401
        %s1403 = sand.u32 %s181, 1
        %s1404 = smul.addr %s1403, 16
        %s1405 = scalar_lea.vmem [#allocation4], %s1404
        // Predicated region
        $region49: #{tpu_custom_call.1} parent=47 // pred_check
          %p1406 = pneg %p191
        $region50: #{tpu_custom_call.1} parent=47 // pred_check_branch
          %1408 = sbr.rel (%p1406) target = $region52
        $region51: #{tpu_custom_call.1} parent=47 // pred_region
          %s1410 = ssub.s32 256, 256
          %1411 = vsyncadd %s1402, %s1410
          %s1412 = smul.addr %s21, 2
          %s1413 = smul.addr %s1412, 128
          %s1414 = scalar_lea.hbm %s7, %s1413
          %s1416 = sshll.u32 %s1405, 4
          %s1417 = int_to_ptr.vmem [resolvable:$true] %s1416
          %1419 = dma.vmem_to_hbm [thread:$0]  %s1417, 256, %s1414, %s1402
        $region52: #{tpu_custom_call.1} parent=47 // pred_fallthru
          _
      $region48: #{tpu_custom_call.1} parent=5 // pred_fallthru
        _
      %p1420 = scmp.le.s32.totalorder 2, %s16
      // Predicated region
      $region53: #{tpu_custom_call.1} parent=5 // pred_check
        %p1421 = pneg %p1420
      $region54: #{tpu_custom_call.1} parent=5 // pred_check_branch
        %1423 = sbr.rel (%p1421) target = $region56
      $region55: #{tpu_custom_call.1} parent=5 // pred_region
        %s1424 = ssub.s32 %s16, 2
        // Predicated region
        $region57: #{tpu_custom_call.1} parent=55 // pred_check
          %p1425 = pneg %p197
        $region58: #{tpu_custom_call.1} parent=55 // pred_check_branch
          %1427 = sbr.rel (%p1425) target = $region60
        $region59: #{tpu_custom_call.1} parent=55 // pred_region
          %s1428 = sand.u32 %s182, 1
          %s1429 = scalar_lea.sflag [#allocation5], %s1428
          %s1430 = sand.u32 %s182, 1
          %s1431 = smul.addr %s1430, 16
          %s1432 = scalar_lea.vmem [#allocation4], %s1431
          %1433 = dma.done %s1429, 256
        $region60: #{tpu_custom_call.1} parent=55 // pred_fallthru
          _
      $region56: #{tpu_custom_call.1} parent=5 // pred_fallthru
        _
    $region6: #{tpu_custom_call.1} parent=1 // loop_footer
      %s20 = sadd.s32 1, %s16
    $region7: #{tpu_custom_call.1} parent=1 // loop_footer_branch
      %15 = sbr.rel target = $region3
    $region8: #{tpu_custom_call.1} parent=1 // loop_exit
      _
    %1434 = vsyncpa [#allocation5], 1
    %s1435 = scalar_lea.sflag [#allocation5], 1
    %1436 = vsyncpa %s1435, 1

</llo_original>
